<compile_context>
chip_gen: v7x
topology: tpu7x:2x2x1
jax: 0.10.0
libtpu: 0.0.40
codegen_flags: <defaults>
</compile_context>

<pallas_src>
import jax
import jax.numpy as jnp
from jax import lax
from jax.experimental import pallas as pl
from jax.experimental.pallas import tpu as pltpu


def _round_up(n, m):
    return ((n + m - 1) // m) * m


def _pad_gate_matrix(w, in_dim_p, h, h_p, dtype):
    """Pad a (in_dim, 4H) gate-stacked matrix [i|f|g|o] per-gate to (in_dim_p, 4*h_p)."""
    in_dim = w.shape[0]
    w4 = w.reshape(in_dim, 4, h).astype(dtype)
    out = jnp.zeros((in_dim_p, 4, h_p), dtype).at[:in_dim, :, :h].set(w4)
    return out.reshape(in_dim_p, 4 * h_p)


def _pad_gate_bias(b, h, h_p):
    """Pad a (4H,) gate-stacked bias per-gate to (1, 4*h_p) float32."""
    b4 = b.reshape(4, h).astype(jnp.float32)
    out = jnp.zeros((4, h_p), jnp.float32).at[:, :h].set(b4)
    return out.reshape(1, 4 * h_p)


def _lstm_timeaware_kernel(x_ref, mask_ref,
                           we_ref, be_ref,
                           wih_ref, whh_ref, bl_ref,
                           wfc_ref, bfc_ref,
                           out_ref,
                           h_scr, c_scr, acc_scr):
    t_blk = pl.program_id(1)
    TT, B, C = x_ref.shape
    H = h_scr.shape[-1]

    @pl.when(t_blk == 0)
    def _init():
        h_scr[...] = jnp.zeros_like(h_scr)
        c_scr[...] = jnp.zeros_like(c_scr)
        acc_scr[...] = jnp.zeros_like(acc_scr)

    # ---- Hoisted, batched input path for the whole time tile (bf16 MXU, f32 acc). ----
    # One (TT*B, C) x (C, V) matmul + ReLU, then one (TT*B, V) x (V, 4H) matmul.
    # Biases are folded once per tile instead of per timestep.
    x_flat = x_ref[...].reshape(TT * B, C)                       # bf16
    e = jnp.dot(x_flat, we_ref[...], preferred_element_type=jnp.float32)
    e = jnp.maximum(e + be_ref[...], 0.0).astype(jnp.bfloat16)
    g_in = jnp.dot(e, wih_ref[...], preferred_element_type=jnp.float32)
    g_in = (g_in + bl_ref[...]).reshape(TT, B, 4 * H)            # f32

    # ---- Serial recurrence: state carried in vregs; only h @ W_hh left inside. ----
    h = h_scr[...]
    c = c_scr[...]
    acc = acc_scr[...]
    for t in range(TT):   # static tile size -> fully unrolled for the LLO scheduler
        gates = g_in[t] + jnp.dot(h.astype(jnp.bfloat16), whh_ref[...],
                                  preferred_element_type=jnp.float32)
        # H is padded to a multiple of 128, so these slices are lane-aligned.
        i_g = jax.nn.sigmoid(gates[:, 0 * H:1 * H])
        f_g = jax.nn.sigmoid(gates[:, 1 * H:2 * H])
        g_g = jnp.tanh(gates[:, 2 * H:3 * H])
        o_g = jax.nn.sigmoid(gates[:, 3 * H:4 * H])
        c = f_g * c + i_g * g_g
        h = o_g * jnp.tanh(c)
        acc = acc + h * mask_ref[t]                              # mask_ref[t]: (B, 1)
    h_scr[...] = h
    c_scr[...] = c
    acc_scr[...] = acc

    # ---- Final projection + lane-dense store on the last time tile of this batch tile. ----
    @pl.when(t_blk == pl.num_programs(1) - 1)
    def _finish():
        pooled = acc_scr[...].astype(jnp.bfloat16)               # dropout: eval-mode identity
        logit = jnp.dot(pooled, wfc_ref[...],
                        preferred_element_type=jnp.float32) + bfc_ref[...]
        out_ref[...] = logit.astype(out_ref.dtype)


def lstm_time_aware_forward(x, mask, params, *, time_tile=8):
    """x: (T, B, n_codes) f32, mask: (T, B) f32 -> logits (B, n_labels) f32."""
    T, B, C = x.shape
    V = params["w_embed"].shape[1]
    H = params["w_hh"].shape[0]
    L = params["b_fc"].shape[0]

    f32, bf16 = jnp.float32, jnp.bfloat16

    TT = time_tile
    T_p = _round_up(T, TT)
    B_p = _round_up(B, 8)
    BB = B_p if B_p <= 128 else 128          # batch tile (parallel grid axis)
    B_p = _round_up(B_p, BB)
    C_p = _round_up(C, 128)
    V_p = _round_up(V, 128)
    H_p = _round_up(H, 128)
    L_p = _round_up(L, 128)

    # Zero padding is inert: padded hidden units keep h = c = 0, padded timesteps have
    # mask = 0, padded fc rows/cols are zero and sliced off at the end.
    xp = jnp.zeros((T_p, B_p, C_p), bf16).at[:T, :B, :C].set(x.astype(bf16))
    mp = jnp.zeros((T_p, B_p, 1), f32).at[:T, :B, 0].set(mask.astype(f32))

    we = jnp.zeros((C_p, V_p), bf16).at[:C, :V].set(params["w_embed"].astype(bf16))
    be = jnp.zeros((1, V_p), f32).at[0, :V].set(params["b_embed"].astype(f32))
    wih = _pad_gate_matrix(params["w_ih"], V_p, H, H_p, bf16)
    whh = _pad_gate_matrix(params["w_hh"], H_p, H, H_p, bf16)
    bl = _pad_gate_bias(params["b_lstm"], H, H_p)
    wfc = jnp.zeros((H_p, L_p), bf16).at[:H, :L].set(params["w_fc"].astype(bf16))
    bfc = jnp.zeros((1, L_p), f32).at[0, :L].set(params["b_fc"].astype(f32))

    n_bt = B_p // BB
    n_tt = T_p // TT

    grid_spec = pltpu.PrefetchScalarGridSpec(
        num_scalar_prefetch=0,
        grid=(n_bt, n_tt),                                       # time (reduction) axis last
        in_specs=[
            pl.BlockSpec((TT, BB, C_p), lambda b, t: (t, b, 0)),  # x: streamed over time
            pl.BlockSpec((TT, BB, 1), lambda b, t: (t, b, 0)),    # mask: streamed over time
            pl.BlockSpec((C_p, V_p), lambda b, t: (0, 0)),        # w_embed (resident)
            pl.BlockSpec((1, V_p), lambda b, t: (0, 0)),          # b_embed
            pl.BlockSpec((V_p, 4 * H_p), lambda b, t: (0, 0)),    # w_ih
            pl.BlockSpec((H_p, 4 * H_p), lambda b, t: (0, 0)),    # w_hh
            pl.BlockSpec((1, 4 * H_p), lambda b, t: (0, 0)),      # b_lstm
            pl.BlockSpec((H_p, L_p), lambda b, t: (0, 0)),        # w_fc
            pl.BlockSpec((1, L_p), lambda b, t: (0, 0)),          # b_fc
        ],
        out_specs=pl.BlockSpec((BB, L_p), lambda b, t: (b, 0)),
        scratch_shapes=[pltpu.VMEM((BB, H_p), f32),   # h  (persists across time tiles)
                        pltpu.VMEM((BB, H_p), f32),   # c
                        pltpu.VMEM((BB, H_p), f32)],  # masked-sum accumulator
    )

    out_p = pl.pallas_call(
        _lstm_timeaware_kernel,
        out_shape=jax.ShapeDtypeStruct((B_p, L_p), f32),
        grid_spec=grid_spec,
        compiler_params=pltpu.CompilerParams(
            dimension_semantics=("parallel", "arbitrary"),
            vmem_limit_bytes=32 * 1024 * 1024),
    )(xp, mp, we, be, wih, whh, bl, wfc, bfc)

    return out_p[:B, :L]


def _reference(x, mask, params):
    """Pure-JAX float32 reference of the same forward pass."""
    H = params["w_hh"].shape[0]
    B = x.shape[1]
    e = jax.nn.relu(x @ params["w_embed"] + params["b_embed"])

    def step(carry, inp):
        h, c = carry
        xt, mt = inp
        gates = xt @ params["w_ih"] + h @ params["w_hh"] + params["b_lstm"]
        i = jax.nn.sigmoid(gates[:, :H])
        f = jax.nn.sigmoid(gates[:, H:2 * H])
        g = jnp.tanh(gates[:, 2 * H:3 * H])
        o = jax.nn.sigmoid(gates[:, 3 * H:])
        c = f * c + i * g
        h = o * jnp.tanh(c)
        return (h, c), h * mt[:, None]

    init = (jnp.zeros((B, H), jnp.float32), jnp.zeros((B, H), jnp.float32))
    _, hs = lax.scan(step, init, (e, mask))
    pooled = hs.sum(0)
    return pooled @ params["w_fc"] + params["b_fc"]


if __name__ == "__main__":
    # Options implied by the module; hidden_size must equal visit_size for the PyTorch
    # forward to be shape-consistent (h0 = zeros(1, B, x.size(2))).
    T, B = 8, 8
    n_codes, visit, hidden, n_labels = 32, 32, 32, 8

    key = jax.random.PRNGKey(0)
    ks = jax.random.split(key, 9)
    s = 0.1
    params = {
        # weights stored transposed (in, out) for right-multiply in the kernel
        "w_embed": s * jax.random.normal(ks[0], (n_codes, visit), jnp.float32),
        "b_embed": s * jax.random.normal(ks[1], (visit,), jnp.float32),
        "w_ih":    s * jax.random.normal(ks[2], (visit, 4 * hidden), jnp.float32),
        "w_hh":    s * jax.random.normal(ks[3], (hidden, 4 * hidden), jnp.float32),
        "b_lstm":  s * jax.random.normal(ks[4], (4 * hidden,), jnp.float32),
        "w_fc":    s * jax.random.normal(ks[5], (hidden, n_labels), jnp.float32),
        "b_fc":    s * jax.random.normal(ks[6], (n_labels,), jnp.float32),
    }

    x = jax.random.normal(ks[7], (T, B, n_codes), jnp.float32)
    mask = (jax.random.uniform(ks[8], (T, B)) > 0.3).astype(jnp.float32)

    out = lstm_time_aware_forward(x, mask, params)
    out = jax.block_until_ready(out)

    ref = jax.block_until_ready(_reference(x, mask, params))
    assert out.shape == (B, n_labels)
    # bf16 matmul operands with f32 accumulation -> slightly looser tolerance than pure f32
    assert bool(jnp.allclose(out, ref, atol=3e-2, rtol=3e-2)), float(
        jnp.max(jnp.abs(out - ref)))

    print("KERNEL_OK")
</pallas_src>

<mosaic_0001>
module attributes {stable_mosaic.version = 11 : i64} {
  func.func @_lstm_timeaware_kernel(%arg0: i32, %arg1: i32, %arg2: memref<8x8x128xbf16, #tpu.memory_space<vmem>>, %arg3: memref<8x8x1xf32, #tpu.memory_space<vmem>>, %arg4: memref<128x128xbf16, #tpu.memory_space<vmem>>, %arg5: memref<1x128xf32, #tpu.memory_space<vmem>>, %arg6: memref<128x512xbf16, #tpu.memory_space<vmem>>, %arg7: memref<128x512xbf16, #tpu.memory_space<vmem>>, %arg8: memref<1x512xf32, #tpu.memory_space<vmem>>, %arg9: memref<128x128xbf16, #tpu.memory_space<vmem>>, %arg10: memref<1x128xf32, #tpu.memory_space<vmem>>, %arg11: memref<8x128xf32, #tpu.memory_space<vmem>>, %arg12: memref<8x128xf32, #tpu.memory_space<vmem>>, %arg13: memref<8x128xf32, #tpu.memory_space<vmem>>, %arg14: memref<8x128xf32, #tpu.memory_space<vmem>>) attributes {dimension_semantics = [#tpu.dimension_semantics<parallel>, #tpu.dimension_semantics<arbitrary>], iteration_bounds = array<i64: 1, 1>, scalar_prefetch = 0 : i64, scratch_operands = 3 : i64, tpu.core_type = #tpu.core_type<tc>, window_params = [{transform_indices = @transform_0, window_bounds = array<i64: 8, 8, 128>}, {transform_indices = @transform_1, window_bounds = array<i64: 8, 8, 1>}, {pipeline_mode = #tpu.pipeline_mode<synchronous>, transform_indices = @transform_2, window_bounds = array<i64: 128, 128>}, {pipeline_mode = #tpu.pipeline_mode<synchronous>, transform_indices = @transform_3, window_bounds = array<i64: 1, 128>}, {pipeline_mode = #tpu.pipeline_mode<synchronous>, transform_indices = @transform_4, window_bounds = array<i64: 128, 512>}, {pipeline_mode = #tpu.pipeline_mode<synchronous>, transform_indices = @transform_5, window_bounds = array<i64: 128, 512>}, {pipeline_mode = #tpu.pipeline_mode<synchronous>, transform_indices = @transform_6, window_bounds = array<i64: 1, 512>}, {pipeline_mode = #tpu.pipeline_mode<synchronous>, transform_indices = @transform_7, window_bounds = array<i64: 128, 128>}, {pipeline_mode = #tpu.pipeline_mode<synchronous>, transform_indices = @transform_8, window_bounds = array<i64: 1, 128>}, {transform_indices = @transform_9, window_bounds = array<i64: 8, 128>}]} {
    %c0_i32 = arith.constant 0 : i32
    %0 = arith.cmpi eq, %arg1, %c0_i32 : i32
    %1 = arith.extui %0 : i1 to i32
    %c0_i32_0 = arith.constant 0 : i32
    %2 = arith.cmpi ne, %1, %c0_i32_0 : i32
    scf.if %2 {
      %cst_92 = arith.constant 0.000000e+00 : f32
      %316 = vector.broadcast %cst_92 : f32 to vector<8x128xf32>
      %c0_93 = arith.constant 0 : index
      %c0_94 = arith.constant 0 : index
      %317 = vector.load %arg12[%c0_93, %c0_94] : memref<8x128xf32, #tpu.memory_space<vmem>>, vector<8x128xf32>
      tpu.vector_store %arg12[%c0_93, %c0_94], %316 {strides = array<i32>} : memref<8x128xf32, #tpu.memory_space<vmem>>, vector<8x128xf32>,
      %cst_95 = arith.constant 0.000000e+00 : f32
      %318 = vector.broadcast %cst_95 : f32 to vector<8x128xf32>
      %c0_96 = arith.constant 0 : index
      %c0_97 = arith.constant 0 : index
      %319 = vector.load %arg13[%c0_96, %c0_97] : memref<8x128xf32, #tpu.memory_space<vmem>>, vector<8x128xf32>
      tpu.vector_store %arg13[%c0_96, %c0_97], %318 {strides = array<i32>} : memref<8x128xf32, #tpu.memory_space<vmem>>, vector<8x128xf32>,
      %cst_98 = arith.constant 0.000000e+00 : f32
      %320 = vector.broadcast %cst_98 : f32 to vector<8x128xf32>
      %c0_99 = arith.constant 0 : index
      %c0_100 = arith.constant 0 : index
      %321 = vector.load %arg14[%c0_99, %c0_100] : memref<8x128xf32, #tpu.memory_space<vmem>>, vector<8x128xf32>
      tpu.vector_store %arg14[%c0_99, %c0_100], %320 {strides = array<i32>} : memref<8x128xf32, #tpu.memory_space<vmem>>, vector<8x128xf32>,
    } else {
    }
    %c0 = arith.constant 0 : index
    %c0_1 = arith.constant 0 : index
    %c0_2 = arith.constant 0 : index
    %3 = vector.load %arg2[%c0, %c0_1, %c0_2] : memref<8x8x128xbf16, #tpu.memory_space<vmem>>, vector<8x8x128xbf16>
    %4 = vector.shape_cast %3 : vector<8x8x128xbf16> to vector<64x128xbf16>
    %c0_3 = arith.constant 0 : index
    %c0_4 = arith.constant 0 : index
    %5 = vector.load %arg4[%c0_3, %c0_4] : memref<128x128xbf16, #tpu.memory_space<vmem>>, vector<128x128xbf16>
    %cst = arith.constant dense<0.000000e+00> : vector<64x128xf32>
    %6 = tpu.matmul %4, %5, %cst {dimension_numbers = #tpu.dot_dimension_numbers<[1], [0], [0], [1], [0, 0, 1, 1], [], []>} : vector<64x128xbf16>, vector<128x128xbf16>, vector<64x128xf32> -> vector<64x128xf32>
    %c0_5 = arith.constant 0 : index
    %c0_6 = arith.constant 0 : index
    %7 = vector.load %arg5[%c0_5, %c0_6] : memref<1x128xf32, #tpu.memory_space<vmem>>, vector<1x128xf32>
    %8 = vector.broadcast %7 : vector<1x128xf32> to vector<64x128xf32>
    %9 = arith.addf %6, %8 : vector<64x128xf32>
    %cst_7 = arith.constant 0.000000e+00 : f32
    %10 = vector.broadcast %cst_7 : f32 to vector<64x128xf32>
    %11 = arith.maximumf %9, %10 : vector<64x128xf32>
    %12 = arith.truncf %11 : vector<64x128xf32> to vector<64x128xbf16>
    %c0_8 = arith.constant 0 : index
    %c0_9 = arith.constant 0 : index
    %13 = vector.load %arg6[%c0_8, %c0_9] : memref<128x512xbf16, #tpu.memory_space<vmem>>, vector<128x512xbf16>
    %cst_10 = arith.constant dense<0.000000e+00> : vector<64x512xf32>
    %14 = tpu.matmul %12, %13, %cst_10 {dimension_numbers = #tpu.dot_dimension_numbers<[1], [0], [0], [1], [0, 0, 1, 1], [], []>} : vector<64x128xbf16>, vector<128x512xbf16>, vector<64x512xf32> -> vector<64x512xf32>
    %c0_11 = arith.constant 0 : index
    %c0_12 = arith.constant 0 : index
    %15 = vector.load %arg8[%c0_11, %c0_12] : memref<1x512xf32, #tpu.memory_space<vmem>>, vector<1x512xf32>
    %16 = vector.broadcast %15 : vector<1x512xf32> to vector<64x512xf32>
    %17 = arith.addf %14, %16 : vector<64x512xf32>
    %18 = vector.shape_cast %17 : vector<64x512xf32> to vector<8x8x512xf32>
    %c0_13 = arith.constant 0 : index
    %c0_14 = arith.constant 0 : index
    %19 = vector.load %arg12[%c0_13, %c0_14] : memref<8x128xf32, #tpu.memory_space<vmem>>, vector<8x128xf32>
    %c0_15 = arith.constant 0 : index
    %c0_16 = arith.constant 0 : index
    %20 = vector.load %arg13[%c0_15, %c0_16] : memref<8x128xf32, #tpu.memory_space<vmem>>, vector<8x128xf32>
    %c0_17 = arith.constant 0 : index
    %c0_18 = arith.constant 0 : index
    %21 = vector.load %arg14[%c0_17, %c0_18] : memref<8x128xf32, #tpu.memory_space<vmem>>, vector<8x128xf32>
    %22 = vector.extract_strided_slice %18 {offsets = [0, 0, 0], sizes = [1, 8, 512], strides = [1, 1, 1]} : vector<8x8x512xf32> to vector<1x8x512xf32>
    %23 = vector.shape_cast %22 : vector<1x8x512xf32> to vector<8x512xf32>
    %24 = arith.truncf %19 : vector<8x128xf32> to vector<8x128xbf16>
    %c0_19 = arith.constant 0 : index
    %c0_20 = arith.constant 0 : index
    %25 = vector.load %arg7[%c0_19, %c0_20] : memref<128x512xbf16, #tpu.memory_space<vmem>>, vector<128x512xbf16>
    %cst_21 = arith.constant dense<0.000000e+00> : vector<8x512xf32>
    %26 = tpu.matmul %24, %25, %cst_21 {dimension_numbers = #tpu.dot_dimension_numbers<[1], [0], [0], [1], [0, 0, 1, 1], [], []>} : vector<8x128xbf16>, vector<128x512xbf16>, vector<8x512xf32> -> vector<8x512xf32>
    %27 = arith.addf %23, %26 : vector<8x512xf32>
    %28 = vector.extract_strided_slice %27 {offsets = [0, 0], sizes = [8, 128], strides = [1, 1]} : vector<8x512xf32> to vector<8x128xf32>
    %29 = arith.negf %28 : vector<8x128xf32>
    %30 = math.exp %29 : vector<8x128xf32>
    %cst_22 = arith.constant 1.000000e+00 : f32
    %31 = vector.broadcast %cst_22 : f32 to vector<8x128xf32>
    %32 = arith.addf %31, %30 : vector<8x128xf32>
    %33 = arith.divf %31, %32 : vector<8x128xf32>
    %34 = vector.extract_strided_slice %27 {offsets = [0, 128], sizes = [8, 128], strides = [1, 1]} : vector<8x512xf32> to vector<8x128xf32>
    %35 = arith.negf %34 : vector<8x128xf32>
    %36 = math.exp %35 : vector<8x128xf32>
    %cst_23 = arith.constant 1.000000e+00 : f32
    %37 = vector.broadcast %cst_23 : f32 to vector<8x128xf32>
    %38 = arith.addf %37, %36 : vector<8x128xf32>
    %39 = arith.divf %37, %38 : vector<8x128xf32>
    %40 = vector.extract_strided_slice %27 {offsets = [0, 256], sizes = [8, 128], strides = [1, 1]} : vector<8x512xf32> to vector<8x128xf32>
    %41 = math.tanh %40 : vector<8x128xf32>
    %42 = vector.extract_strided_slice %27 {offsets = [0, 384], sizes = [8, 128], strides = [1, 1]} : vector<8x512xf32> to vector<8x128xf32>
    %43 = arith.negf %42 : vector<8x128xf32>
    %44 = math.exp %43 : vector<8x128xf32>
    %cst_24 = arith.constant 1.000000e+00 : f32
    %45 = vector.broadcast %cst_24 : f32 to vector<8x128xf32>
    %46 = arith.addf %45, %44 : vector<8x128xf32>
    %47 = arith.divf %45, %46 : vector<8x128xf32>
    %48 = arith.mulf %39, %20 : vector<8x128xf32>
    %49 = arith.mulf %33, %41 : vector<8x128xf32>
    %50 = arith.addf %48, %49 : vector<8x128xf32>
    %51 = math.tanh %50 : vector<8x128xf32>
    %52 = arith.mulf %47, %51 : vector<8x128xf32>
    %c0_25 = arith.constant 0 : index
    %c0_26 = arith.constant 0 : index
    %c0_27 = arith.constant 0 : index
    %53 = vector.load %arg3[%c0_25, %c0_26, %c0_27] : memref<8x8x1xf32, #tpu.memory_space<vmem>>, vector<1x8x1xf32>
    %54 = vector.shape_cast %53 : vector<1x8x1xf32> to vector<8x1xf32>
    %55 = vector.broadcast %54 : vector<8x1xf32> to vector<8x128xf32>
    %56 = arith.mulf %52, %55 : vector<8x128xf32>
    %57 = arith.addf %21, %56 : vector<8x128xf32>
    %58 = vector.extract_strided_slice %18 {offsets = [1, 0, 0], sizes = [1, 8, 512], strides = [1, 1, 1]} : vector<8x8x512xf32> to vector<1x8x512xf32>
    %59 = vector.shape_cast %58 : vector<1x8x512xf32> to vector<8x512xf32>
    %60 = arith.truncf %52 : vector<8x128xf32> to vector<8x128xbf16>
    %c0_28 = arith.constant 0 : index
    %c0_29 = arith.constant 0 : index
    %61 = vector.load %arg7[%c0_28, %c0_29] : memref<128x512xbf16, #tpu.memory_space<vmem>>, vector<128x512xbf16>
    %cst_30 = arith.constant dense<0.000000e+00> : vector<8x512xf32>
    %62 = tpu.matmul %60, %61, %cst_30 {dimension_numbers = #tpu.dot_dimension_numbers<[1], [0], [0], [1], [0, 0, 1, 1], [], []>} : vector<8x128xbf16>, vector<128x512xbf16>, vector<8x512xf32> -> vector<8x512xf32>
    %63 = arith.addf %59, %62 : vector<8x512xf32>
    %64 = vector.extract_strided_slice %63 {offsets = [0, 0], sizes = [8, 128], strides = [1, 1]} : vector<8x512xf32> to vector<8x128xf32>
    %65 = arith.negf %64 : vector<8x128xf32>
    %66 = math.exp %65 : vector<8x128xf32>
    %cst_31 = arith.constant 1.000000e+00 : f32
    %67 = vector.broadcast %cst_31 : f32 to vector<8x128xf32>
    %68 = arith.addf %67, %66 : vector<8x128xf32>
    %69 = arith.divf %67, %68 : vector<8x128xf32>
    %70 = vector.extract_strided_slice %63 {offsets = [0, 128], sizes = [8, 128], strides = [1, 1]} : vector<8x512xf32> to vector<8x128xf32>
    %71 = arith.negf %70 : vector<8x128xf32>
    %72 = math.exp %71 : vector<8x128xf32>
    %cst_32 = arith.constant 1.000000e+00 : f32
    %73 = vector.broadcast %cst_32 : f32 to vector<8x128xf32>
    %74 = arith.addf %73, %72 : vector<8x128xf32>
    %75 = arith.divf %73, %74 : vector<8x128xf32>
    %76 = vector.extract_strided_slice %63 {offsets = [0, 256], sizes = [8, 128], strides = [1, 1]} : vector<8x512xf32> to vector<8x128xf32>
    %77 = math.tanh %76 : vector<8x128xf32>
    %78 = vector.extract_strided_slice %63 {offsets = [0, 384], sizes = [8, 128], strides = [1, 1]} : vector<8x512xf32> to vector<8x128xf32>
    %79 = arith.negf %78 : vector<8x128xf32>
    %80 = math.exp %79 : vector<8x128xf32>
    %cst_33 = arith.constant 1.000000e+00 : f32
    %81 = vector.broadcast %cst_33 : f32 to vector<8x128xf32>
    %82 = arith.addf %81, %80 : vector<8x128xf32>
    %83 = arith.divf %81, %82 : vector<8x128xf32>
    %84 = arith.mulf %75, %50 : vector<8x128xf32>
    %85 = arith.mulf %69, %77 : vector<8x128xf32>
    %86 = arith.addf %84, %85 : vector<8x128xf32>
    %87 = math.tanh %86 : vector<8x128xf32>
    %88 = arith.mulf %83, %87 : vector<8x128xf32>
    %c1 = arith.constant 1 : index
    %c0_34 = arith.constant 0 : index
    %c0_35 = arith.constant 0 : index
    %89 = vector.load %arg3[%c1, %c0_34, %c0_35] : memref<8x8x1xf32, #tpu.memory_space<vmem>>, vector<1x8x1xf32>
    %90 = vector.shape_cast %89 : vector<1x8x1xf32> to vector<8x1xf32>
    %91 = vector.broadcast %90 : vector<8x1xf32> to vector<8x128xf32>
    %92 = arith.mulf %88, %91 : vector<8x128xf32>
    %93 = arith.addf %57, %92 : vector<8x128xf32>
    %94 = vector.extract_strided_slice %18 {offsets = [2, 0, 0], sizes = [1, 8, 512], strides = [1, 1, 1]} : vector<8x8x512xf32> to vector<1x8x512xf32>
    %95 = vector.shape_cast %94 : vector<1x8x512xf32> to vector<8x512xf32>
    %96 = arith.truncf %88 : vector<8x128xf32> to vector<8x128xbf16>
    %c0_36 = arith.constant 0 : index
    %c0_37 = arith.constant 0 : index
    %97 = vector.load %arg7[%c0_36, %c0_37] : memref<128x512xbf16, #tpu.memory_space<vmem>>, vector<128x512xbf16>
    %cst_38 = arith.constant dense<0.000000e+00> : vector<8x512xf32>
    %98 = tpu.matmul %96, %97, %cst_38 {dimension_numbers = #tpu.dot_dimension_numbers<[1], [0], [0], [1], [0, 0, 1, 1], [], []>} : vector<8x128xbf16>, vector<128x512xbf16>, vector<8x512xf32> -> vector<8x512xf32>
    %99 = arith.addf %95, %98 : vector<8x512xf32>
    %100 = vector.extract_strided_slice %99 {offsets = [0, 0], sizes = [8, 128], strides = [1, 1]} : vector<8x512xf32> to vector<8x128xf32>
    %101 = arith.negf %100 : vector<8x128xf32>
    %102 = math.exp %101 : vector<8x128xf32>
    %cst_39 = arith.constant 1.000000e+00 : f32
    %103 = vector.broadcast %cst_39 : f32 to vector<8x128xf32>
    %104 = arith.addf %103, %102 : vector<8x128xf32>
    %105 = arith.divf %103, %104 : vector<8x128xf32>
    %106 = vector.extract_strided_slice %99 {offsets = [0, 128], sizes = [8, 128], strides = [1, 1]} : vector<8x512xf32> to vector<8x128xf32>
    %107 = arith.negf %106 : vector<8x128xf32>
    %108 = math.exp %107 : vector<8x128xf32>
    %cst_40 = arith.constant 1.000000e+00 : f32
    %109 = vector.broadcast %cst_40 : f32 to vector<8x128xf32>
    %110 = arith.addf %109, %108 : vector<8x128xf32>
    %111 = arith.divf %109, %110 : vector<8x128xf32>
    %112 = vector.extract_strided_slice %99 {offsets = [0, 256], sizes = [8, 128], strides = [1, 1]} : vector<8x512xf32> to vector<8x128xf32>
    %113 = math.tanh %112 : vector<8x128xf32>
    %114 = vector.extract_strided_slice %99 {offsets = [0, 384], sizes = [8, 128], strides = [1, 1]} : vector<8x512xf32> to vector<8x128xf32>
    %115 = arith.negf %114 : vector<8x128xf32>
    %116 = math.exp %115 : vector<8x128xf32>
    %cst_41 = arith.constant 1.000000e+00 : f32
    %117 = vector.broadcast %cst_41 : f32 to vector<8x128xf32>
    %118 = arith.addf %117, %116 : vector<8x128xf32>
    %119 = arith.divf %117, %118 : vector<8x128xf32>
    %120 = arith.mulf %111, %86 : vector<8x128xf32>
    %121 = arith.mulf %105, %113 : vector<8x128xf32>
    %122 = arith.addf %120, %121 : vector<8x128xf32>
    %123 = math.tanh %122 : vector<8x128xf32>
    %124 = arith.mulf %119, %123 : vector<8x128xf32>
    %c2 = arith.constant 2 : index
    %c0_42 = arith.constant 0 : index
    %c0_43 = arith.constant 0 : index
    %125 = vector.load %arg3[%c2, %c0_42, %c0_43] : memref<8x8x1xf32, #tpu.memory_space<vmem>>, vector<1x8x1xf32>
    %126 = vector.shape_cast %125 : vector<1x8x1xf32> to vector<8x1xf32>
    %127 = vector.broadcast %126 : vector<8x1xf32> to vector<8x128xf32>
    %128 = arith.mulf %124, %127 : vector<8x128xf32>
    %129 = arith.addf %93, %128 : vector<8x128xf32>
    %130 = vector.extract_strided_slice %18 {offsets = [3, 0, 0], sizes = [1, 8, 512], strides = [1, 1, 1]} : vector<8x8x512xf32> to vector<1x8x512xf32>
    %131 = vector.shape_cast %130 : vector<1x8x512xf32> to vector<8x512xf32>
    %132 = arith.truncf %124 : vector<8x128xf32> to vector<8x128xbf16>
    %c0_44 = arith.constant 0 : index
    %c0_45 = arith.constant 0 : index
    %133 = vector.load %arg7[%c0_44, %c0_45] : memref<128x512xbf16, #tpu.memory_space<vmem>>, vector<128x512xbf16>
    %cst_46 = arith.constant dense<0.000000e+00> : vector<8x512xf32>
    %134 = tpu.matmul %132, %133, %cst_46 {dimension_numbers = #tpu.dot_dimension_numbers<[1], [0], [0], [1], [0, 0, 1, 1], [], []>} : vector<8x128xbf16>, vector<128x512xbf16>, vector<8x512xf32> -> vector<8x512xf32>
    %135 = arith.addf %131, %134 : vector<8x512xf32>
    %136 = vector.extract_strided_slice %135 {offsets = [0, 0], sizes = [8, 128], strides = [1, 1]} : vector<8x512xf32> to vector<8x128xf32>
    %137 = arith.negf %136 : vector<8x128xf32>
    %138 = math.exp %137 : vector<8x128xf32>
    %cst_47 = arith.constant 1.000000e+00 : f32
    %139 = vector.broadcast %cst_47 : f32 to vector<8x128xf32>
    %140 = arith.addf %139, %138 : vector<8x128xf32>
    %141 = arith.divf %139, %140 : vector<8x128xf32>
    %142 = vector.extract_strided_slice %135 {offsets = [0, 128], sizes = [8, 128], strides = [1, 1]} : vector<8x512xf32> to vector<8x128xf32>
    %143 = arith.negf %142 : vector<8x128xf32>
    %144 = math.exp %143 : vector<8x128xf32>
    %cst_48 = arith.constant 1.000000e+00 : f32
    %145 = vector.broadcast %cst_48 : f32 to vector<8x128xf32>
    %146 = arith.addf %145, %144 : vector<8x128xf32>
    %147 = arith.divf %145, %146 : vector<8x128xf32>
    %148 = vector.extract_strided_slice %135 {offsets = [0, 256], sizes = [8, 128], strides = [1, 1]} : vector<8x512xf32> to vector<8x128xf32>
    %149 = math.tanh %148 : vector<8x128xf32>
    %150 = vector.extract_strided_slice %135 {offsets = [0, 384], sizes = [8, 128], strides = [1, 1]} : vector<8x512xf32> to vector<8x128xf32>
    %151 = arith.negf %150 : vector<8x128xf32>
    %152 = math.exp %151 : vector<8x128xf32>
    %cst_49 = arith.constant 1.000000e+00 : f32
    %153 = vector.broadcast %cst_49 : f32 to vector<8x128xf32>
    %154 = arith.addf %153, %152 : vector<8x128xf32>
    %155 = arith.divf %153, %154 : vector<8x128xf32>
    %156 = arith.mulf %147, %122 : vector<8x128xf32>
    %157 = arith.mulf %141, %149 : vector<8x128xf32>
    %158 = arith.addf %156, %157 : vector<8x128xf32>
    %159 = math.tanh %158 : vector<8x128xf32>
    %160 = arith.mulf %155, %159 : vector<8x128xf32>
    %c3 = arith.constant 3 : index
    %c0_50 = arith.constant 0 : index
    %c0_51 = arith.constant 0 : index
    %161 = vector.load %arg3[%c3, %c0_50, %c0_51] : memref<8x8x1xf32, #tpu.memory_space<vmem>>, vector<1x8x1xf32>
    %162 = vector.shape_cast %161 : vector<1x8x1xf32> to vector<8x1xf32>
    %163 = vector.broadcast %162 : vector<8x1xf32> to vector<8x128xf32>
    %164 = arith.mulf %160, %163 : vector<8x128xf32>
    %165 = arith.addf %129, %164 : vector<8x128xf32>
    %166 = vector.extract_strided_slice %18 {offsets = [4, 0, 0], sizes = [1, 8, 512], strides = [1, 1, 1]} : vector<8x8x512xf32> to vector<1x8x512xf32>
    %167 = vector.shape_cast %166 : vector<1x8x512xf32> to vector<8x512xf32>
    %168 = arith.truncf %160 : vector<8x128xf32> to vector<8x128xbf16>
    %c0_52 = arith.constant 0 : index
    %c0_53 = arith.constant 0 : index
    %169 = vector.load %arg7[%c0_52, %c0_53] : memref<128x512xbf16, #tpu.memory_space<vmem>>, vector<128x512xbf16>
    %cst_54 = arith.constant dense<0.000000e+00> : vector<8x512xf32>
    %170 = tpu.matmul %168, %169, %cst_54 {dimension_numbers = #tpu.dot_dimension_numbers<[1], [0], [0], [1], [0, 0, 1, 1], [], []>} : vector<8x128xbf16>, vector<128x512xbf16>, vector<8x512xf32> -> vector<8x512xf32>
    %171 = arith.addf %167, %170 : vector<8x512xf32>
    %172 = vector.extract_strided_slice %171 {offsets = [0, 0], sizes = [8, 128], strides = [1, 1]} : vector<8x512xf32> to vector<8x128xf32>
    %173 = arith.negf %172 : vector<8x128xf32>
    %174 = math.exp %173 : vector<8x128xf32>
    %cst_55 = arith.constant 1.000000e+00 : f32
    %175 = vector.broadcast %cst_55 : f32 to vector<8x128xf32>
    %176 = arith.addf %175, %174 : vector<8x128xf32>
    %177 = arith.divf %175, %176 : vector<8x128xf32>
    %178 = vector.extract_strided_slice %171 {offsets = [0, 128], sizes = [8, 128], strides = [1, 1]} : vector<8x512xf32> to vector<8x128xf32>
    %179 = arith.negf %178 : vector<8x128xf32>
    %180 = math.exp %179 : vector<8x128xf32>
    %cst_56 = arith.constant 1.000000e+00 : f32
    %181 = vector.broadcast %cst_56 : f32 to vector<8x128xf32>
    %182 = arith.addf %181, %180 : vector<8x128xf32>
    %183 = arith.divf %181, %182 : vector<8x128xf32>
    %184 = vector.extract_strided_slice %171 {offsets = [0, 256], sizes = [8, 128], strides = [1, 1]} : vector<8x512xf32> to vector<8x128xf32>
    %185 = math.tanh %184 : vector<8x128xf32>
    %186 = vector.extract_strided_slice %171 {offsets = [0, 384], sizes = [8, 128], strides = [1, 1]} : vector<8x512xf32> to vector<8x128xf32>
    %187 = arith.negf %186 : vector<8x128xf32>
    %188 = math.exp %187 : vector<8x128xf32>
    %cst_57 = arith.constant 1.000000e+00 : f32
    %189 = vector.broadcast %cst_57 : f32 to vector<8x128xf32>
    %190 = arith.addf %189, %188 : vector<8x128xf32>
    %191 = arith.divf %189, %190 : vector<8x128xf32>
    %192 = arith.mulf %183, %158 : vector<8x128xf32>
    %193 = arith.mulf %177, %185 : vector<8x128xf32>
    %194 = arith.addf %192, %193 : vector<8x128xf32>
    %195 = math.tanh %194 : vector<8x128xf32>
    %196 = arith.mulf %191, %195 : vector<8x128xf32>
    %c4 = arith.constant 4 : index
    %c0_58 = arith.constant 0 : index
    %c0_59 = arith.constant 0 : index
    %197 = vector.load %arg3[%c4, %c0_58, %c0_59] : memref<8x8x1xf32, #tpu.memory_space<vmem>>, vector<1x8x1xf32>
    %198 = vector.shape_cast %197 : vector<1x8x1xf32> to vector<8x1xf32>
    %199 = vector.broadcast %198 : vector<8x1xf32> to vector<8x128xf32>
    %200 = arith.mulf %196, %199 : vector<8x128xf32>
    %201 = arith.addf %165, %200 : vector<8x128xf32>
    %202 = vector.extract_strided_slice %18 {offsets = [5, 0, 0], sizes = [1, 8, 512], strides = [1, 1, 1]} : vector<8x8x512xf32> to vector<1x8x512xf32>
    %203 = vector.shape_cast %202 : vector<1x8x512xf32> to vector<8x512xf32>
    %204 = arith.truncf %196 : vector<8x128xf32> to vector<8x128xbf16>
    %c0_60 = arith.constant 0 : index
    %c0_61 = arith.constant 0 : index
    %205 = vector.load %arg7[%c0_60, %c0_61] : memref<128x512xbf16, #tpu.memory_space<vmem>>, vector<128x512xbf16>
    %cst_62 = arith.constant dense<0.000000e+00> : vector<8x512xf32>
    %206 = tpu.matmul %204, %205, %cst_62 {dimension_numbers = #tpu.dot_dimension_numbers<[1], [0], [0], [1], [0, 0, 1, 1], [], []>} : vector<8x128xbf16>, vector<128x512xbf16>, vector<8x512xf32> -> vector<8x512xf32>
    %207 = arith.addf %203, %206 : vector<8x512xf32>
    %208 = vector.extract_strided_slice %207 {offsets = [0, 0], sizes = [8, 128], strides = [1, 1]} : vector<8x512xf32> to vector<8x128xf32>
    %209 = arith.negf %208 : vector<8x128xf32>
    %210 = math.exp %209 : vector<8x128xf32>
    %cst_63 = arith.constant 1.000000e+00 : f32
    %211 = vector.broadcast %cst_63 : f32 to vector<8x128xf32>
    %212 = arith.addf %211, %210 : vector<8x128xf32>
    %213 = arith.divf %211, %212 : vector<8x128xf32>
    %214 = vector.extract_strided_slice %207 {offsets = [0, 128], sizes = [8, 128], strides = [1, 1]} : vector<8x512xf32> to vector<8x128xf32>
    %215 = arith.negf %214 : vector<8x128xf32>
    %216 = math.exp %215 : vector<8x128xf32>
    %cst_64 = arith.constant 1.000000e+00 : f32
    %217 = vector.broadcast %cst_64 : f32 to vector<8x128xf32>
    %218 = arith.addf %217, %216 : vector<8x128xf32>
    %219 = arith.divf %217, %218 : vector<8x128xf32>
    %220 = vector.extract_strided_slice %207 {offsets = [0, 256], sizes = [8, 128], strides = [1, 1]} : vector<8x512xf32> to vector<8x128xf32>
    %221 = math.tanh %220 : vector<8x128xf32>
    %222 = vector.extract_strided_slice %207 {offsets = [0, 384], sizes = [8, 128], strides = [1, 1]} : vector<8x512xf32> to vector<8x128xf32>
    %223 = arith.negf %222 : vector<8x128xf32>
    %224 = math.exp %223 : vector<8x128xf32>
    %cst_65 = arith.constant 1.000000e+00 : f32
    %225 = vector.broadcast %cst_65 : f32 to vector<8x128xf32>
    %226 = arith.addf %225, %224 : vector<8x128xf32>
    %227 = arith.divf %225, %226 : vector<8x128xf32>
    %228 = arith.mulf %219, %194 : vector<8x128xf32>
    %229 = arith.mulf %213, %221 : vector<8x128xf32>
    %230 = arith.addf %228, %229 : vector<8x128xf32>
    %231 = math.tanh %230 : vector<8x128xf32>
    %232 = arith.mulf %227, %231 : vector<8x128xf32>
    %c5 = arith.constant 5 : index
    %c0_66 = arith.constant 0 : index
    %c0_67 = arith.constant 0 : index
    %233 = vector.load %arg3[%c5, %c0_66, %c0_67] : memref<8x8x1xf32, #tpu.memory_space<vmem>>, vector<1x8x1xf32>
    %234 = vector.shape_cast %233 : vector<1x8x1xf32> to vector<8x1xf32>
    %235 = vector.broadcast %234 : vector<8x1xf32> to vector<8x128xf32>
    %236 = arith.mulf %232, %235 : vector<8x128xf32>
    %237 = arith.addf %201, %236 : vector<8x128xf32>
    %238 = vector.extract_strided_slice %18 {offsets = [6, 0, 0], sizes = [1, 8, 512], strides = [1, 1, 1]} : vector<8x8x512xf32> to vector<1x8x512xf32>
    %239 = vector.shape_cast %238 : vector<1x8x512xf32> to vector<8x512xf32>
    %240 = arith.truncf %232 : vector<8x128xf32> to vector<8x128xbf16>
    %c0_68 = arith.constant 0 : index
    %c0_69 = arith.constant 0 : index
    %241 = vector.load %arg7[%c0_68, %c0_69] : memref<128x512xbf16, #tpu.memory_space<vmem>>, vector<128x512xbf16>
    %cst_70 = arith.constant dense<0.000000e+00> : vector<8x512xf32>
    %242 = tpu.matmul %240, %241, %cst_70 {dimension_numbers = #tpu.dot_dimension_numbers<[1], [0], [0], [1], [0, 0, 1, 1], [], []>} : vector<8x128xbf16>, vector<128x512xbf16>, vector<8x512xf32> -> vector<8x512xf32>
    %243 = arith.addf %239, %242 : vector<8x512xf32>
    %244 = vector.extract_strided_slice %243 {offsets = [0, 0], sizes = [8, 128], strides = [1, 1]} : vector<8x512xf32> to vector<8x128xf32>
    %245 = arith.negf %244 : vector<8x128xf32>
    %246 = math.exp %245 : vector<8x128xf32>
    %cst_71 = arith.constant 1.000000e+00 : f32
    %247 = vector.broadcast %cst_71 : f32 to vector<8x128xf32>
    %248 = arith.addf %247, %246 : vector<8x128xf32>
    %249 = arith.divf %247, %248 : vector<8x128xf32>
    %250 = vector.extract_strided_slice %243 {offsets = [0, 128], sizes = [8, 128], strides = [1, 1]} : vector<8x512xf32> to vector<8x128xf32>
    %251 = arith.negf %250 : vector<8x128xf32>
    %252 = math.exp %251 : vector<8x128xf32>
    %cst_72 = arith.constant 1.000000e+00 : f32
    %253 = vector.broadcast %cst_72 : f32 to vector<8x128xf32>
    %254 = arith.addf %253, %252 : vector<8x128xf32>
    %255 = arith.divf %253, %254 : vector<8x128xf32>
    %256 = vector.extract_strided_slice %243 {offsets = [0, 256], sizes = [8, 128], strides = [1, 1]} : vector<8x512xf32> to vector<8x128xf32>
    %257 = math.tanh %256 : vector<8x128xf32>
    %258 = vector.extract_strided_slice %243 {offsets = [0, 384], sizes = [8, 128], strides = [1, 1]} : vector<8x512xf32> to vector<8x128xf32>
    %259 = arith.negf %258 : vector<8x128xf32>
    %260 = math.exp %259 : vector<8x128xf32>
    %cst_73 = arith.constant 1.000000e+00 : f32
    %261 = vector.broadcast %cst_73 : f32 to vector<8x128xf32>
    %262 = arith.addf %261, %260 : vector<8x128xf32>
    %263 = arith.divf %261, %262 : vector<8x128xf32>
    %264 = arith.mulf %255, %230 : vector<8x128xf32>
    %265 = arith.mulf %249, %257 : vector<8x128xf32>
    %266 = arith.addf %264, %265 : vector<8x128xf32>
    %267 = math.tanh %266 : vector<8x128xf32>
    %268 = arith.mulf %263, %267 : vector<8x128xf32>
    %c6 = arith.constant 6 : index
    %c0_74 = arith.constant 0 : index
    %c0_75 = arith.constant 0 : index
    %269 = vector.load %arg3[%c6, %c0_74, %c0_75] : memref<8x8x1xf32, #tpu.memory_space<vmem>>, vector<1x8x1xf32>
    %270 = vector.shape_cast %269 : vector<1x8x1xf32> to vector<8x1xf32>
    %271 = vector.broadcast %270 : vector<8x1xf32> to vector<8x128xf32>
    %272 = arith.mulf %268, %271 : vector<8x128xf32>
    %273 = arith.addf %237, %272 : vector<8x128xf32>
    %274 = vector.extract_strided_slice %18 {offsets = [7, 0, 0], sizes = [1, 8, 512], strides = [1, 1, 1]} : vector<8x8x512xf32> to vector<1x8x512xf32>
    %275 = vector.shape_cast %274 : vector<1x8x512xf32> to vector<8x512xf32>
    %276 = arith.truncf %268 : vector<8x128xf32> to vector<8x128xbf16>
    %c0_76 = arith.constant 0 : index
    %c0_77 = arith.constant 0 : index
    %277 = vector.load %arg7[%c0_76, %c0_77] : memref<128x512xbf16, #tpu.memory_space<vmem>>, vector<128x512xbf16>
    %cst_78 = arith.constant dense<0.000000e+00> : vector<8x512xf32>
    %278 = tpu.matmul %276, %277, %cst_78 {dimension_numbers = #tpu.dot_dimension_numbers<[1], [0], [0], [1], [0, 0, 1, 1], [], []>} : vector<8x128xbf16>, vector<128x512xbf16>, vector<8x512xf32> -> vector<8x512xf32>
    %279 = arith.addf %275, %278 : vector<8x512xf32>
    %280 = vector.extract_strided_slice %279 {offsets = [0, 0], sizes = [8, 128], strides = [1, 1]} : vector<8x512xf32> to vector<8x128xf32>
    %281 = arith.negf %280 : vector<8x128xf32>
    %282 = math.exp %281 : vector<8x128xf32>
    %cst_79 = arith.constant 1.000000e+00 : f32
    %283 = vector.broadcast %cst_79 : f32 to vector<8x128xf32>
    %284 = arith.addf %283, %282 : vector<8x128xf32>
    %285 = arith.divf %283, %284 : vector<8x128xf32>
    %286 = vector.extract_strided_slice %279 {offsets = [0, 128], sizes = [8, 128], strides = [1, 1]} : vector<8x512xf32> to vector<8x128xf32>
    %287 = arith.negf %286 : vector<8x128xf32>
    %288 = math.exp %287 : vector<8x128xf32>
    %cst_80 = arith.constant 1.000000e+00 : f32
    %289 = vector.broadcast %cst_80 : f32 to vector<8x128xf32>
    %290 = arith.addf %289, %288 : vector<8x128xf32>
    %291 = arith.divf %289, %290 : vector<8x128xf32>
    %292 = vector.extract_strided_slice %279 {offsets = [0, 256], sizes = [8, 128], strides = [1, 1]} : vector<8x512xf32> to vector<8x128xf32>
    %293 = math.tanh %292 : vector<8x128xf32>
    %294 = vector.extract_strided_slice %279 {offsets = [0, 384], sizes = [8, 128], strides = [1, 1]} : vector<8x512xf32> to vector<8x128xf32>
    %295 = arith.negf %294 : vector<8x128xf32>
    %296 = math.exp %295 : vector<8x128xf32>
    %cst_81 = arith.constant 1.000000e+00 : f32
    %297 = vector.broadcast %cst_81 : f32 to vector<8x128xf32>
    %298 = arith.addf %297, %296 : vector<8x128xf32>
    %299 = arith.divf %297, %298 : vector<8x128xf32>
    %300 = arith.mulf %291, %266 : vector<8x128xf32>
    %301 = arith.mulf %285, %293 : vector<8x128xf32>
    %302 = arith.addf %300, %301 : vector<8x128xf32>
    %303 = math.tanh %302 : vector<8x128xf32>
    %304 = arith.mulf %299, %303 : vector<8x128xf32>
    %c7 = arith.constant 7 : index
    %c0_82 = arith.constant 0 : index
    %c0_83 = arith.constant 0 : index
    %305 = vector.load %arg3[%c7, %c0_82, %c0_83] : memref<8x8x1xf32, #tpu.memory_space<vmem>>, vector<1x8x1xf32>
    %306 = vector.shape_cast %305 : vector<1x8x1xf32> to vector<8x1xf32>
    %307 = vector.broadcast %306 : vector<8x1xf32> to vector<8x128xf32>
    %308 = arith.mulf %304, %307 : vector<8x128xf32>
    %309 = arith.addf %273, %308 : vector<8x128xf32>
    %c0_84 = arith.constant 0 : index
    %c0_85 = arith.constant 0 : index
    %310 = vector.load %arg12[%c0_84, %c0_85] : memref<8x128xf32, #tpu.memory_space<vmem>>, vector<8x128xf32>
    tpu.vector_store %arg12[%c0_84, %c0_85], %304 {strides = array<i32>} : memref<8x128xf32, #tpu.memory_space<vmem>>, vector<8x128xf32>,
    %c0_86 = arith.constant 0 : index
    %c0_87 = arith.constant 0 : index
    %311 = vector.load %arg13[%c0_86, %c0_87] : memref<8x128xf32, #tpu.memory_space<vmem>>, vector<8x128xf32>
    tpu.vector_store %arg13[%c0_86, %c0_87], %302 {strides = array<i32>} : memref<8x128xf32, #tpu.memory_space<vmem>>, vector<8x128xf32>,
    %c0_88 = arith.constant 0 : index
    %c0_89 = arith.constant 0 : index
    %312 = vector.load %arg14[%c0_88, %c0_89] : memref<8x128xf32, #tpu.memory_space<vmem>>, vector<8x128xf32>
    tpu.vector_store %arg14[%c0_88, %c0_89], %309 {strides = array<i32>} : memref<8x128xf32, #tpu.memory_space<vmem>>, vector<8x128xf32>,
    %c0_i32_90 = arith.constant 0 : i32
    %313 = arith.cmpi eq, %arg1, %c0_i32_90 : i32
    %314 = arith.extui %313 : i1 to i32
    %c0_i32_91 = arith.constant 0 : i32
    %315 = arith.cmpi ne, %314, %c0_i32_91 : i32
    scf.if %315 {
      %c0_92 = arith.constant 0 : index
      %c0_93 = arith.constant 0 : index
      %316 = vector.load %arg14[%c0_92, %c0_93] : memref<8x128xf32, #tpu.memory_space<vmem>>, vector<8x128xf32>
      %317 = arith.truncf %316 : vector<8x128xf32> to vector<8x128xbf16>
      %c0_94 = arith.constant 0 : index
      %c0_95 = arith.constant 0 : index
      %318 = vector.load %arg9[%c0_94, %c0_95] : memref<128x128xbf16, #tpu.memory_space<vmem>>, vector<128x128xbf16>
      %cst_96 = arith.constant dense<0.000000e+00> : vector<8x128xf32>
      %319 = tpu.matmul %317, %318, %cst_96 {dimension_numbers = #tpu.dot_dimension_numbers<[1], [0], [0], [1], [0, 0, 1, 1], [], []>} : vector<8x128xbf16>, vector<128x128xbf16>, vector<8x128xf32> -> vector<8x128xf32>
      %c0_97 = arith.constant 0 : index
      %c0_98 = arith.constant 0 : index
      %320 = vector.load %arg10[%c0_97, %c0_98] : memref<1x128xf32, #tpu.memory_space<vmem>>, vector<1x128xf32>
      %321 = vector.broadcast %320 : vector<1x128xf32> to vector<8x128xf32>
      %322 = arith.addf %319, %321 : vector<8x128xf32>
      %c0_99 = arith.constant 0 : index
      %c0_100 = arith.constant 0 : index
      %323 = vector.load %arg11[%c0_99, %c0_100] : memref<8x128xf32, #tpu.memory_space<vmem>>, vector<8x128xf32>
      tpu.vector_store %arg11[%c0_99, %c0_100], %322 {strides = array<i32>} : memref<8x128xf32, #tpu.memory_space<vmem>>, vector<8x128xf32>,
    } else {
    }
    return
  }
  func.func @transform_0(%arg0: i32, %arg1: i32) -> (i32, i32, i32) {
    %c0_i32 = arith.constant 0 : i32
    %c0_i32_0 = arith.constant 0 : i32
    return %arg1, %arg0, %c0_i32 : i32, i32, i32
  }
  func.func @transform_1(%arg0: i32, %arg1: i32) -> (i32, i32, i32) {
    %c0_i32 = arith.constant 0 : i32
    %c0_i32_0 = arith.constant 0 : i32
    return %arg1, %arg0, %c0_i32 : i32, i32, i32
  }
  func.func @transform_2(%arg0: i32, %arg1: i32) -> (i32, i32) {
    %c0_i32 = arith.constant 0 : i32
    %c0_i32_0 = arith.constant 0 : i32
    %c0_i32_1 = arith.constant 0 : i32
    return %c0_i32, %c0_i32_0 : i32, i32
  }
  func.func @transform_3(%arg0: i32, %arg1: i32) -> (i32, i32) {
    %c0_i32 = arith.constant 0 : i32
    %c0_i32_0 = arith.constant 0 : i32
    %c0_i32_1 = arith.constant 0 : i32
    return %c0_i32, %c0_i32_0 : i32, i32
  }
  func.func @transform_4(%arg0: i32, %arg1: i32) -> (i32, i32) {
    %c0_i32 = arith.constant 0 : i32
    %c0_i32_0 = arith.constant 0 : i32
    %c0_i32_1 = arith.constant 0 : i32
    return %c0_i32, %c0_i32_0 : i32, i32
  }
  func.func @transform_5(%arg0: i32, %arg1: i32) -> (i32, i32) {
    %c0_i32 = arith.constant 0 : i32
    %c0_i32_0 = arith.constant 0 : i32
    %c0_i32_1 = arith.constant 0 : i32
    return %c0_i32, %c0_i32_0 : i32, i32
  }
  func.func @transform_6(%arg0: i32, %arg1: i32) -> (i32, i32) {
    %c0_i32 = arith.constant 0 : i32
    %c0_i32_0 = arith.constant 0 : i32
    %c0_i32_1 = arith.constant 0 : i32
    return %c0_i32, %c0_i32_0 : i32, i32
  }
  func.func @transform_7(%arg0: i32, %arg1: i32) -> (i32, i32) {
    %c0_i32 = arith.constant 0 : i32
    %c0_i32_0 = arith.constant 0 : i32
    %c0_i32_1 = arith.constant 0 : i32
    return %c0_i32, %c0_i32_0 : i32, i32
  }
  func.func @transform_8(%arg0: i32, %arg1: i32) -> (i32, i32) {
    %c0_i32 = arith.constant 0 : i32
    %c0_i32_0 = arith.constant 0 : i32
    %c0_i32_1 = arith.constant 0 : i32
    return %c0_i32, %c0_i32_0 : i32, i32
  }
  func.func @transform_9(%arg0: i32, %arg1: i32) -> (i32, i32) {
    %c0_i32 = arith.constant 0 : i32
    %c0_i32_0 = arith.constant 0 : i32
    return %arg0, %c0_i32 : i32, i32
  }
}

</mosaic_0001>

<llo_original>
// kernel: tpu_custom_call.1
$region0: #{tpu_custom_call.1}
  #allocation0 [shape = 'u32[]', space=smem, size = 0x4, offset = 0x4, fixed_abs, tag = 'smem constant byte address 0x4 - core index']
  #allocation1 [shape = 'u32[144,128]{1,0:T(1,128)}', space=vmem, size = 0x12000, scoped, tag = 'internal scratch']
  #allocation2 [shape = 'f32[8,128]{1,0:T(8,128)}', space=vmem, size = 0x1000, scoped, tag = 'scratch operand']
  #allocation3 [shape = 'f32[8,128]{1,0:T(8,128)}', space=vmem, size = 0x1000, scoped, tag = 'scratch operand']
  #allocation4 [shape = 'f32[8,128]{1,0:T(8,128)}', space=vmem, size = 0x1000, scoped, tag = 'scratch operand']
  %s0 = inlined_call_operand.hbm [shape: bf16[8,8,128], index: 0, kind: input, shape index: {}]
  %s1 = inlined_call_operand.vmem [shape: f32[8,8,1], index: 1, kind: input, shape index: {}]
  %s2 = inlined_call_operand.vmem [shape: bf16[128,128], index: 2, kind: input, shape index: {}]
  %s3 = inlined_call_operand.vmem [shape: f32[1,128], index: 3, kind: input, shape index: {}]
  %s4 = inlined_call_operand.hbm [shape: bf16[128,512], index: 4, kind: input, shape index: {}]
  %s5 = inlined_call_operand.hbm [shape: bf16[128,512], index: 5, kind: input, shape index: {}]
  %s6 = inlined_call_operand.vmem [shape: f32[1,512], index: 6, kind: input, shape index: {}]
  %s7 = inlined_call_operand.hbm [shape: bf16[128,128], index: 7, kind: input, shape index: {}]
  %s8 = inlined_call_operand.vmem [shape: f32[1,128], index: 8, kind: input, shape index: {}]
  %s9 = inlined_call_operand.hbm [shape: f32[8,128], index: 9, kind: output, shape index: {}]
  %s10 = sld [smem:[#allocation0]]
  $region70: #{tpu_custom_call.1} parent=0
    _
  %s12 = ssub.s32 1, %s10
  %s13 = scalar_select 0, %s12, %s10
  $region1: #{tpu_custom_call.1} parent=0
    #allocation5 [shape = 'u8[16384]{0}', space=vmem, size = 0x4000, scoped, tag = 'input window, operand 0, single buffered']
    #allocation6 [shape = 's32[1]{0}', space=sflag, size = 0x4, scoped, tag = 'scoped memory for tpu_custom_call.1']
    #allocation7 [shape = 's32[1]{0}', space=sflag, size = 0x4, scoped, tag = 'scoped memory for tpu_custom_call.1']
    #allocation8 [shape = 'u8[131072]{0}', space=vmem, size = 0x20000, scoped, tag = 'input window, operand 4, single buffered']
    #allocation9 [shape = 's32[1]{0}', space=sflag, size = 0x4, scoped, tag = 'scoped memory for tpu_custom_call.1']
    #allocation10 [shape = 'u8[131072]{0}', space=vmem, size = 0x20000, scoped, tag = 'input window, operand 5, single buffered']
    #allocation11 [shape = 'u8[32768]{0}', space=vmem, size = 0x8000, scoped, tag = 'input window, operand 7, single buffered']
    #allocation12 [shape = 's32[1]{0}', space=sflag, size = 0x4, scoped, tag = 'scoped memory for tpu_custom_call.1']
    #allocation13 [shape = 'u8[4096]{0}', space=vmem, size = 0x1000, scoped, tag = 'output window, operand 0, single buffered']
    %14 = vsyncpa [#allocation6], 0
    %15 = vsyncpa [#allocation9], 0
    %16 = vsyncpa [#allocation12], 0
    %17 = vsyncpa [#allocation7], 0
    // Predicated region
    $region2: #{tpu_custom_call.1} parent=1 // pred_check
      _
    $region3: #{tpu_custom_call.1} parent=1 // pred_check_branch
      %19 = sbr.rel (0) target = $region5
    $region4: #{tpu_custom_call.1} parent=1 // pred_region
      %s21 = ssub.s32 512, 512
      %22 = vsyncadd [#allocation6], %s21
      %s23 = sshll.u32 [#allocation5], 4
      %s24 = int_to_ptr.vmem [resolvable:$true] %s23
      %29 = dma.hbm_to_vmem [thread:$0]  %s0, 512, %s24, [#allocation6], 64, 64, 4
    $region5: #{tpu_custom_call.1} parent=1 // pred_fallthru
      _
    // Predicated region
    $region6: #{tpu_custom_call.1} parent=1 // pred_check
      _
    $region7: #{tpu_custom_call.1} parent=1 // pred_check_branch
      %31 = sbr.rel (0) target = $region9
    $region8: #{tpu_custom_call.1} parent=1 // pred_region
      _
    $region9: #{tpu_custom_call.1} parent=1 // pred_fallthru
      _
    // Predicated region
    $region10: #{tpu_custom_call.1} parent=1 // pred_check
      _
    $region11: #{tpu_custom_call.1} parent=1 // pred_check_branch
      %33 = sbr.rel (0) target = $region13
    $region12: #{tpu_custom_call.1} parent=1 // pred_region
      _
    $region13: #{tpu_custom_call.1} parent=1 // pred_fallthru
      _
    // Predicated region
    $region14: #{tpu_custom_call.1} parent=1 // pred_check
      _
    $region15: #{tpu_custom_call.1} parent=1 // pred_check_branch
      %35 = sbr.rel (0) target = $region17
    $region16: #{tpu_custom_call.1} parent=1 // pred_region
      _
    $region17: #{tpu_custom_call.1} parent=1 // pred_fallthru
      _
    // Predicated region
    $region18: #{tpu_custom_call.1} parent=1 // pred_check
      _
    $region19: #{tpu_custom_call.1} parent=1 // pred_check_branch
      %37 = sbr.rel (0) target = $region21
    $region20: #{tpu_custom_call.1} parent=1 // pred_region
      %s39 = ssub.s32 4096, 4096
      %40 = vsyncadd [#allocation9], %s39
      %s41 = sshll.u32 [#allocation8], 4
      %s42 = int_to_ptr.vmem [resolvable:$true] %s41
      %47 = dma.hbm_to_vmem [thread:$0]  %s4, 4096, %s42, [#allocation9], 256, 256, 16
    $region21: #{tpu_custom_call.1} parent=1 // pred_fallthru
      _
    // Predicated region
    $region22: #{tpu_custom_call.1} parent=1 // pred_check
      _
    $region23: #{tpu_custom_call.1} parent=1 // pred_check_branch
      %49 = sbr.rel (0) target = $region25
    $region24: #{tpu_custom_call.1} parent=1 // pred_region
      %s51 = ssub.s32 4096, 4096
      %52 = vsyncadd [#allocation9], %s51
      %s53 = sshll.u32 [#allocation10], 4
      %s54 = int_to_ptr.vmem [resolvable:$true] %s53
      %59 = dma.hbm_to_vmem [thread:$0]  %s5, 4096, %s54, [#allocation9], 256, 256, 16
    $region25: #{tpu_custom_call.1} parent=1 // pred_fallthru
      _
    // Predicated region
    $region26: #{tpu_custom_call.1} parent=1 // pred_check
      _
    $region27: #{tpu_custom_call.1} parent=1 // pred_check_branch
      %61 = sbr.rel (0) target = $region29
    $region28: #{tpu_custom_call.1} parent=1 // pred_region
      _
    $region29: #{tpu_custom_call.1} parent=1 // pred_fallthru
      _
    // Predicated region
    $region30: #{tpu_custom_call.1} parent=1 // pred_check
      _
    $region31: #{tpu_custom_call.1} parent=1 // pred_check_branch
      %63 = sbr.rel (0) target = $region33
    $region32: #{tpu_custom_call.1} parent=1 // pred_region
      %s65 = ssub.s32 1024, 1024
      %66 = vsyncadd [#allocation12], %s65
      %s67 = sshll.u32 [#allocation11], 4
      %s68 = int_to_ptr.vmem [resolvable:$true] %s67
      %73 = dma.hbm_to_vmem [thread:$0]  %s7, 1024, %s68, [#allocation12], 64, 64, 4
    $region33: #{tpu_custom_call.1} parent=1 // pred_fallthru
      _
    // Predicated region
    $region34: #{tpu_custom_call.1} parent=1 // pred_check
      _
    $region35: #{tpu_custom_call.1} parent=1 // pred_check_branch
      %75 = sbr.rel (0) target = $region37
    $region36: #{tpu_custom_call.1} parent=1 // pred_region
      _
    $region37: #{tpu_custom_call.1} parent=1 // pred_fallthru
      _
    // Predicated region
    $region38: #{tpu_custom_call.1} parent=1 // pred_check
      _
    $region39: #{tpu_custom_call.1} parent=1 // pred_check_branch
      %77 = sbr.rel (0) target = $region41
    $region40: #{tpu_custom_call.1} parent=1 // pred_region
      %78 = dma.done [#allocation6], 512
    $region41: #{tpu_custom_call.1} parent=1 // pred_fallthru
      _
    // Predicated region
    $region42: #{tpu_custom_call.1} parent=1 // pred_check
      _
    $region43: #{tpu_custom_call.1} parent=1 // pred_check_branch
      %80 = sbr.rel (0) target = $region45
    $region44: #{tpu_custom_call.1} parent=1 // pred_region
      %81 = dma.done [#allocation9], 4096
    $region45: #{tpu_custom_call.1} parent=1 // pred_fallthru
      _
    // Predicated region
    $region46: #{tpu_custom_call.1} parent=1 // pred_check
      _
    $region47: #{tpu_custom_call.1} parent=1 // pred_check_branch
      %83 = sbr.rel (0) target = $region49
    $region48: #{tpu_custom_call.1} parent=1 // pred_region
      %84 = dma.done [#allocation9], 4096
    $region49: #{tpu_custom_call.1} parent=1 // pred_fallthru
      _
    // Predicated region
    $region50: #{tpu_custom_call.1} parent=1 // pred_check
      _
    $region51: #{tpu_custom_call.1} parent=1 // pred_check_branch
      %86 = sbr.rel (0) target = $region53
    $region52: #{tpu_custom_call.1} parent=1 // pred_region
      %87 = dma.done [#allocation12], 1024
    $region53: #{tpu_custom_call.1} parent=1 // pred_fallthru
      _
    %p89 = scmp.eq.s32.totalorder 0, 0
    // Predicated region
    $region54: #{tpu_custom_call.1} parent=1 // pred_check
      %p90 = pneg %p89
    $region55: #{tpu_custom_call.1} parent=1 // pred_check_branch
      %92 = sbr.rel (%p90) target = $region57
    $region56: #{tpu_custom_call.1} parent=1 // pred_region
      %93 = vst [vmem:[#allocation2] sm:$0xff] 0.0
      %94 = vst [vmem:[#allocation3] sm:$0xff] 0.0
      %95 = vst [vmem:[#allocation4] sm:$0xff] 0.0
    $region57: #{tpu_custom_call.1} parent=1 // pred_fallthru
      _
    %v96 = vld [vmem:[#allocation5] sm:$0xf]
    %v97 = vld [vmem:[#allocation5 + $0x4] sm:$0xf]
    %v98 = vld [vmem:[#allocation5 + $0x8] sm:$0xf]
    %v99 = vld [vmem:[#allocation5 + $0xc] sm:$0xf]
    %v100 = vld [vmem:[#allocation5 + $0x10] sm:$0xf]
    %v101 = vld [vmem:[#allocation5 + $0x14] sm:$0xf]
    %v102 = vld [vmem:[#allocation5 + $0x18] sm:$0xf]
    %v103 = vld [vmem:[#allocation5 + $0x1c] sm:$0xf]
    %v104 = vld [vmem:[%s2] sm:$0xf]
    %v105 = vld [vmem:[%s2 + $0x4] sm:$0xf]
    %v106 = vld [vmem:[%s2 + $0x8] sm:$0xf]
    %v107 = vld [vmem:[%s2 + $0xc] sm:$0xf]
    %v108 = vld [vmem:[%s2 + $0x10] sm:$0xf]
    %v109 = vld [vmem:[%s2 + $0x14] sm:$0xf]
    %v110 = vld [vmem:[%s2 + $0x18] sm:$0xf]
    %v111 = vld [vmem:[%s2 + $0x1c] sm:$0xf]
    %v112 = vld [vmem:[%s2 + $0x20] sm:$0xf]
    %v113 = vld [vmem:[%s2 + $0x24] sm:$0xf]
    %v114 = vld [vmem:[%s2 + $0x28] sm:$0xf]
    %v115 = vld [vmem:[%s2 + $0x2c] sm:$0xf]
    %v116 = vld [vmem:[%s2 + $0x30] sm:$0xf]
    %v117 = vld [vmem:[%s2 + $0x34] sm:$0xf]
    %v118 = vld [vmem:[%s2 + $0x38] sm:$0xf]
    %v119 = vld [vmem:[%s2 + $0x3c] sm:$0xf]
    %v120 = vld [vmem:[%s3] sm:$0x1]
    %v122 = vlaneseq
    %v123 = vshrl.u32 %v122, 7
    %v124 = vsub.s32 0, %v123
    %v125 = vrot.slane %v120, %v124
    %v135 = vunpack.c.l.b16 %v96
    %v136 = vunpack.c.l.b16 %v97
    %v137 = vunpack.c.l.b16 %v98
    %v138 = vunpack.c.l.b16 %v99
    %v139 = vunpack.c.l.b16 %v100
    %v140 = vunpack.c.l.b16 %v101
    %v141 = vunpack.c.l.b16 %v102
    %v142 = vunpack.c.l.b16 %v103
    %v143 = vpack.c.b16 %v136, %v135
    %v144 = vpack.c.b16 %v138, %v137
    %v145 = vpack.c.b16 %v140, %v139
    %v146 = vpack.c.b16 %v142, %v141
    %v167 = vunpack.c.l.b16 %v104
    %v168 = vunpack.c.l.b16 %v105
    %v169 = vunpack.c.l.b16 %v106
    %v170 = vunpack.c.l.b16 %v107
    %v171 = vunpack.c.l.b16 %v108
    %v172 = vunpack.c.l.b16 %v109
    %v173 = vunpack.c.l.b16 %v110
    %v174 = vunpack.c.l.b16 %v111
    %v175 = vunpack.c.l.b16 %v112
    %v176 = vunpack.c.l.b16 %v113
    %v177 = vunpack.c.l.b16 %v114
    %v178 = vunpack.c.l.b16 %v115
    %v179 = vunpack.c.l.b16 %v116
    %v180 = vunpack.c.l.b16 %v117
    %v181 = vunpack.c.l.b16 %v118
    %v182 = vunpack.c.l.b16 %v119
    %v183 = vpack.c.b16 %v168, %v167
    %v184 = vpack.c.b16 %v170, %v169
    %v185 = vpack.c.b16 %v172, %v171
    %v186 = vpack.c.b16 %v174, %v173
    %v187 = vpack.c.b16 %v176, %v175
    %v188 = vpack.c.b16 %v178, %v177
    %v189 = vpack.c.b16 %v180, %v179
    %v190 = vpack.c.b16 %v182, %v181
    %199 = vmatprep.subr.bf16.mxu0 0
    %200 = vmatpush1.bf16.msra.mxu0 %v183
    %201 = vmatprep.subr.bf16.mxu0 0
    %202 = vmatpush1.bf16.msra.mxu0 %v184
    %203 = vmatprep.subr.bf16.mxu0 0
    %204 = vmatpush1.bf16.msra.mxu0 %v185
    %205 = vmatprep.subr.bf16.mxu0 0
    %206 = vmatpush1.bf16.msra.mxu0 %v186
    %207 = vmatprep.subr.bf16.mxu0 0
    %208 = vmatpush1.bf16.msra.mxu0 %v187
    %209 = vmatprep.subr.bf16.mxu0 0
    %210 = vmatpush1.bf16.msra.mxu0 %v188
    %211 = vmatprep.subr.bf16.mxu0 0
    %212 = vmatpush1.bf16.msra.mxu0 %v189
    %213 = vmatprep.subr.bf16.mxu0 0
    %214 = vmatpush1.bf16.msra.mxu0 %v190
    %215 = vmatprep.subr.bf16.mxu0 0
    %216 = vmatpush1.bf16.msra.mxu0 0
    %217 = vmatprep.subr.bf16.mxu0 0
    %218 = vmatpush1.bf16.msra.mxu0 0
    %219 = vmatprep.subr.bf16.mxu0 0
    %220 = vmatpush1.bf16.msra.mxu0 0
    %221 = vmatprep.subr.bf16.mxu0 0
    %222 = vmatpush1.bf16.msra.mxu0 0
    %223 = vmatprep.subr.bf16.mxu0 0
    %224 = vmatpush1.bf16.msra.mxu0 0
    %225 = vmatprep.subr.bf16.mxu0 0
    %226 = vmatpush1.bf16.msra.mxu0 0
    %227 = vmatprep.subr.bf16.mxu0 0
    %228 = vmatpush1.bf16.msra.mxu0 0
    %229 = vmatprep.subr.bf16.mxu0 0
    %230 = vmatpush1.bf16.msra.mxu0 0
    %231 = vmatprep.mubr.bf16.mxu0 0
    %232 = vmatmul.mubr.bf16.gmra.mrb[0].mxu0 %v143
    %v233 = vpop.f32.mrb[0].mxu0
    %v234 = vadd.f32 %v125, %v233
    %v235 = vpop.f32.mrb[0].mxu0
    %v236 = vpop.f32.mrb[0].mxu0
    %v237 = vadd.f32 %v125, %v236
    %v238 = vpop.f32.mrb[0].mxu0
    %239 = vmatprep.mubr.bf16.mxu0 0
    %240 = vmatmul.mubr.bf16.gmra.mrb[0].mxu0 %v144
    %v241 = vpop.f32.mrb[0].mxu0
    %v242 = vadd.f32 %v125, %v241
    %v243 = vpop.f32.mrb[0].mxu0
    %v244 = vpop.f32.mrb[0].mxu0
    %v245 = vadd.f32 %v125, %v244
    %v246 = vpop.f32.mrb[0].mxu0
    %247 = vmatprep.mubr.bf16.mxu0 0
    %248 = vmatmul.mubr.bf16.gmra.mrb[0].mxu0 %v145
    %v249 = vpop.f32.mrb[0].mxu0
    %v250 = vadd.f32 %v125, %v249
    %v251 = vpop.f32.mrb[0].mxu0
    %v252 = vpop.f32.mrb[0].mxu0
    %v253 = vadd.f32 %v125, %v252
    %v254 = vpop.f32.mrb[0].mxu0
    %255 = vmatprep.mubr.bf16.mxu0 0
    %256 = vmatmul.mubr.bf16.gmra.mrb[0].mxu0 %v146
    %v257 = vpop.f32.mrb[0].mxu0
    %v258 = vadd.f32 %v125, %v257
    %v259 = vpop.f32.mrb[0].mxu0
    %v260 = vpop.f32.mrb[0].mxu0
    %v261 = vadd.f32 %v125, %v260
    %v262 = vpop.f32.mrb[0].mxu0
    %263 = vdwg.mxu0
    %v264 = vmax.f32 %v234, 0.0
    %v265 = vmax.f32 %v237, 0.0
    %v266 = vmax.f32 %v242, 0.0
    %v267 = vmax.f32 %v245, 0.0
    %v268 = vmax.f32 %v250, 0.0
    %v269 = vmax.f32 %v253, 0.0
    %v270 = vmax.f32 %v258, 0.0
    %v271 = vmax.f32 %v261, 0.0
    %v272 = vpack.c.bf16 %v265, %v264
    %v273 = vpack.c.bf16 %v267, %v266
    %v274 = vpack.c.bf16 %v269, %v268
    %v275 = vpack.c.bf16 %v271, %v270
    %v276 = vld [vmem:[#allocation8] sm:$0xff]
    %v277 = vld [vmem:[#allocation8 + $0x8] sm:$0xff]
    %v278 = vld [vmem:[#allocation8 + $0x10] sm:$0xff]
    %v279 = vld [vmem:[#allocation8 + $0x18] sm:$0xff]
    %v280 = vld [vmem:[#allocation8 + $0x20] sm:$0xff]
    %v281 = vld [vmem:[#allocation8 + $0x28] sm:$0xff]
    %v282 = vld [vmem:[#allocation8 + $0x30] sm:$0xff]
    %v283 = vld [vmem:[#allocation8 + $0x38] sm:$0xff]
    %v284 = vld [vmem:[#allocation8 + $0x40] sm:$0xff]
    %v285 = vld [vmem:[#allocation8 + $0x48] sm:$0xff]
    %v286 = vld [vmem:[#allocation8 + $0x50] sm:$0xff]
    %v287 = vld [vmem:[#allocation8 + $0x58] sm:$0xff]
    %v288 = vld [vmem:[#allocation8 + $0x60] sm:$0xff]
    %v289 = vld [vmem:[#allocation8 + $0x68] sm:$0xff]
    %v290 = vld [vmem:[#allocation8 + $0x70] sm:$0xff]
    %v291 = vld [vmem:[#allocation8 + $0x78] sm:$0xff]
    %v292 = vld [vmem:[#allocation8 + $0x80] sm:$0xff]
    %v293 = vld [vmem:[#allocation8 + $0x88] sm:$0xff]
    %v294 = vld [vmem:[#allocation8 + $0x90] sm:$0xff]
    %v295 = vld [vmem:[#allocation8 + $0x98] sm:$0xff]
    %v296 = vld [vmem:[#allocation8 + $0xa0] sm:$0xff]
    %v297 = vld [vmem:[#allocation8 + $0xa8] sm:$0xff]
    %v298 = vld [vmem:[#allocation8 + $0xb0] sm:$0xff]
    %v299 = vld [vmem:[#allocation8 + $0xb8] sm:$0xff]
    %v300 = vld [vmem:[#allocation8 + $0xc0] sm:$0xff]
    %v301 = vld [vmem:[#allocation8 + $0xc8] sm:$0xff]
    %v302 = vld [vmem:[#allocation8 + $0xd0] sm:$0xff]
    %v303 = vld [vmem:[#allocation8 + $0xd8] sm:$0xff]
    %v304 = vld [vmem:[#allocation8 + $0xe0] sm:$0xff]
    %v305 = vld [vmem:[#allocation8 + $0xe8] sm:$0xff]
    %v306 = vld [vmem:[#allocation8 + $0xf0] sm:$0xff]
    %v307 = vld [vmem:[#allocation8 + $0xf8] sm:$0xff]
    %v308 = vld [vmem:[%s6] sm:$0xf]
    %v310 = vlaneseq
    %v311 = vshrl.u32 %v310, 7
    %v312 = vsub.s32 0, %v311
    %v313 = vrot.slane %v308, %v312
    %v314 = vlaneseq
    %v315 = vshrl.u32 %v314, 7
    %v316 = vsub.s32 1, %v315
    %v317 = vrot.slane %v308, %v316
    %v318 = vlaneseq
    %v319 = vshrl.u32 %v318, 7
    %v320 = vsub.s32 2, %v319
    %v321 = vrot.slane %v308, %v320
    %v322 = vlaneseq
    %v323 = vshrl.u32 %v322, 7
    %v324 = vsub.s32 3, %v323
    %v325 = vrot.slane %v308, %v324
    %v362 = vunpack.c.l.b16 %v276
    %v363 = vunpack.c.h.b16 %v276
    %v364 = vunpack.c.l.b16 %v277
    %v365 = vunpack.c.h.b16 %v277
    %v366 = vunpack.c.l.b16 %v278
    %v367 = vunpack.c.h.b16 %v278
    %v368 = vunpack.c.l.b16 %v279
    %v369 = vunpack.c.h.b16 %v279
    %v370 = vunpack.c.l.b16 %v280
    %v371 = vunpack.c.h.b16 %v280
    %v372 = vunpack.c.l.b16 %v281
    %v373 = vunpack.c.h.b16 %v281
    %v374 = vunpack.c.l.b16 %v282
    %v375 = vunpack.c.h.b16 %v282
    %v376 = vunpack.c.l.b16 %v283
    %v377 = vunpack.c.h.b16 %v283
    %v378 = vunpack.c.l.b16 %v284
    %v379 = vunpack.c.h.b16 %v284
    %v380 = vunpack.c.l.b16 %v285
    %v381 = vunpack.c.h.b16 %v285
    %v382 = vunpack.c.l.b16 %v286
    %v383 = vunpack.c.h.b16 %v286
    %v384 = vunpack.c.l.b16 %v287
    %v385 = vunpack.c.h.b16 %v287
    %v386 = vunpack.c.l.b16 %v288
    %v387 = vunpack.c.h.b16 %v288
    %v388 = vunpack.c.l.b16 %v289
    %v389 = vunpack.c.h.b16 %v289
    %v390 = vunpack.c.l.b16 %v290
    %v391 = vunpack.c.h.b16 %v290
    %v392 = vunpack.c.l.b16 %v291
    %v393 = vunpack.c.h.b16 %v291
    %v394 = vunpack.c.l.b16 %v292
    %v395 = vunpack.c.h.b16 %v292
    %v396 = vunpack.c.l.b16 %v293
    %v397 = vunpack.c.h.b16 %v293
    %v398 = vunpack.c.l.b16 %v294
    %v399 = vunpack.c.h.b16 %v294
    %v400 = vunpack.c.l.b16 %v295
    %v401 = vunpack.c.h.b16 %v295
    %v402 = vunpack.c.l.b16 %v296
    %v403 = vunpack.c.h.b16 %v296
    %v404 = vunpack.c.l.b16 %v297
    %v405 = vunpack.c.h.b16 %v297
    %v406 = vunpack.c.l.b16 %v298
    %v407 = vunpack.c.h.b16 %v298
    %v408 = vunpack.c.l.b16 %v299
    %v409 = vunpack.c.h.b16 %v299
    %v410 = vunpack.c.l.b16 %v300
    %v411 = vunpack.c.h.b16 %v300
    %v412 = vunpack.c.l.b16 %v301
    %v413 = vunpack.c.h.b16 %v301
    %v414 = vunpack.c.l.b16 %v302
    %v415 = vunpack.c.h.b16 %v302
    %v416 = vunpack.c.l.b16 %v303
    %v417 = vunpack.c.h.b16 %v303
    %v418 = vunpack.c.l.b16 %v304
    %v419 = vunpack.c.h.b16 %v304
    %v420 = vunpack.c.l.b16 %v305
    %v421 = vunpack.c.h.b16 %v305
    %v422 = vunpack.c.l.b16 %v306
    %v423 = vunpack.c.h.b16 %v306
    %v424 = vunpack.c.l.b16 %v307
    %v425 = vunpack.c.h.b16 %v307
    %v426 = vpack.c.b16 %v366, %v362
    %v427 = vpack.c.b16 %v367, %v363
    %v428 = vpack.c.b16 %v368, %v364
    %v429 = vpack.c.b16 %v369, %v365
    %v430 = vpack.c.b16 %v374, %v370
    %v431 = vpack.c.b16 %v375, %v371
    %v432 = vpack.c.b16 %v376, %v372
    %v433 = vpack.c.b16 %v377, %v373
    %v434 = vpack.c.b16 %v382, %v378
    %v435 = vpack.c.b16 %v383, %v379
    %v436 = vpack.c.b16 %v384, %v380
    %v437 = vpack.c.b16 %v385, %v381
    %v438 = vpack.c.b16 %v390, %v386
    %v439 = vpack.c.b16 %v391, %v387
    %v440 = vpack.c.b16 %v392, %v388
    %v441 = vpack.c.b16 %v393, %v389
    %v442 = vpack.c.b16 %v398, %v394
    %v443 = vpack.c.b16 %v399, %v395
    %v444 = vpack.c.b16 %v400, %v396
    %v445 = vpack.c.b16 %v401, %v397
    %v446 = vpack.c.b16 %v406, %v402
    %v447 = vpack.c.b16 %v407, %v403
    %v448 = vpack.c.b16 %v408, %v404
    %v449 = vpack.c.b16 %v409, %v405
    %v450 = vpack.c.b16 %v414, %v410
    %v451 = vpack.c.b16 %v415, %v411
    %v452 = vpack.c.b16 %v416, %v412
    %v453 = vpack.c.b16 %v417, %v413
    %v454 = vpack.c.b16 %v422, %v418
    %v455 = vpack.c.b16 %v423, %v419
    %v456 = vpack.c.b16 %v424, %v420
    %v457 = vpack.c.b16 %v425, %v421
    %490 = vmatprep.subr.bf16.mxu0 %v427
    %491 = vmatpush1.bf16.msra.mxu0 %v426
    %492 = vmatprep.subr.bf16.mxu0 %v431
    %493 = vmatpush1.bf16.msra.mxu0 %v430
    %494 = vmatprep.subr.bf16.mxu0 %v435
    %495 = vmatpush1.bf16.msra.mxu0 %v434
    %496 = vmatprep.subr.bf16.mxu0 %v439
    %497 = vmatpush1.bf16.msra.mxu0 %v438
    %498 = vmatprep.subr.bf16.mxu0 %v443
    %499 = vmatpush1.bf16.msra.mxu0 %v442
    %500 = vmatprep.subr.bf16.mxu0 %v447
    %501 = vmatpush1.bf16.msra.mxu0 %v446
    %502 = vmatprep.subr.bf16.mxu0 %v451
    %503 = vmatpush1.bf16.msra.mxu0 %v450
    %504 = vmatprep.subr.bf16.mxu0 %v455
    %505 = vmatpush1.bf16.msra.mxu0 %v454
    %506 = vmatprep.subr.bf16.mxu0 0
    %507 = vmatpush1.bf16.msra.mxu0 0
    %508 = vmatprep.subr.bf16.mxu0 0
    %509 = vmatpush1.bf16.msra.mxu0 0
    %510 = vmatprep.subr.bf16.mxu0 0
    %511 = vmatpush1.bf16.msra.mxu0 0
    %512 = vmatprep.subr.bf16.mxu0 0
    %513 = vmatpush1.bf16.msra.mxu0 0
    %514 = vmatprep.subr.bf16.mxu0 0
    %515 = vmatpush1.bf16.msra.mxu0 0
    %516 = vmatprep.subr.bf16.mxu0 0
    %517 = vmatpush1.bf16.msra.mxu0 0
    %518 = vmatprep.subr.bf16.mxu0 0
    %519 = vmatpush1.bf16.msra.mxu0 0
    %520 = vmatprep.subr.bf16.mxu0 0
    %521 = vmatpush1.bf16.msra.mxu0 0
    %522 = vmatprep.mubr.bf16.mxu0 0
    %523 = vmatmul.mubr.bf16.gmra.mrb[0].mxu0 %v272
    %v524 = vpop.f32.mrb[0].mxu0
    %v525 = vadd.f32 %v313, %v524
    %v526 = vpop.f32.mrb[0].mxu0
    %v527 = vadd.f32 %v317, %v526
    %v528 = vpop.f32.mrb[0].mxu0
    %v529 = vadd.f32 %v313, %v528
    %v530 = vpop.f32.mrb[0].mxu0
    %v531 = vadd.f32 %v317, %v530
    %532 = vmatprep.mubr.bf16.mxu0 0
    %533 = vmatmul.mubr.bf16.gmra.mrb[0].mxu0 %v273
    %v534 = vpop.f32.mrb[0].mxu0
    %v535 = vadd.f32 %v313, %v534
    %v536 = vpop.f32.mrb[0].mxu0
    %v537 = vadd.f32 %v317, %v536
    %v538 = vpop.f32.mrb[0].mxu0
    %v539 = vadd.f32 %v313, %v538
    %v540 = vpop.f32.mrb[0].mxu0
    %v541 = vadd.f32 %v317, %v540
    %542 = vmatprep.mubr.bf16.mxu0 0
    %543 = vmatmul.mubr.bf16.gmra.mrb[0].mxu0 %v274
    %v544 = vpop.f32.mrb[0].mxu0
    %v545 = vadd.f32 %v313, %v544
    %v546 = vpop.f32.mrb[0].mxu0
    %v547 = vadd.f32 %v317, %v546
    %v548 = vpop.f32.mrb[0].mxu0
    %v549 = vadd.f32 %v313, %v548
    %v550 = vpop.f32.mrb[0].mxu0
    %v551 = vadd.f32 %v317, %v550
    %552 = vmatprep.mubr.bf16.mxu0 0
    %553 = vmatmul.mubr.bf16.gmra.mrb[0].mxu0 %v275
    %v554 = vpop.f32.mrb[0].mxu0
    %v555 = vadd.f32 %v313, %v554
    %v556 = vpop.f32.mrb[0].mxu0
    %v557 = vadd.f32 %v317, %v556
    %v558 = vpop.f32.mrb[0].mxu0
    %v559 = vadd.f32 %v313, %v558
    %v560 = vpop.f32.mrb[0].mxu0
    %v561 = vadd.f32 %v317, %v560
    %562 = vdwg.mxu0
    %563 = vmatprep.subr.bf16.mxu0 %v429
    %564 = vmatpush1.bf16.msra.mxu0 %v428
    %565 = vmatprep.subr.bf16.mxu0 %v433
    %566 = vmatpush1.bf16.msra.mxu0 %v432
    %567 = vmatprep.subr.bf16.mxu0 %v437
    %568 = vmatpush1.bf16.msra.mxu0 %v436
    %569 = vmatprep.subr.bf16.mxu0 %v441
    %570 = vmatpush1.bf16.msra.mxu0 %v440
    %571 = vmatprep.subr.bf16.mxu0 %v445
    %572 = vmatpush1.bf16.msra.mxu0 %v444
    %573 = vmatprep.subr.bf16.mxu0 %v449
    %574 = vmatpush1.bf16.msra.mxu0 %v448
    %575 = vmatprep.subr.bf16.mxu0 %v453
    %576 = vmatpush1.bf16.msra.mxu0 %v452
    %577 = vmatprep.subr.bf16.mxu0 %v457
    %578 = vmatpush1.bf16.msra.mxu0 %v456
    %579 = vmatprep.subr.bf16.mxu0 0
    %580 = vmatpush1.bf16.msra.mxu0 0
    %581 = vmatprep.subr.bf16.mxu0 0
    %582 = vmatpush1.bf16.msra.mxu0 0
    %583 = vmatprep.subr.bf16.mxu0 0
    %584 = vmatpush1.bf16.msra.mxu0 0
    %585 = vmatprep.subr.bf16.mxu0 0
    %586 = vmatpush1.bf16.msra.mxu0 0
    %587 = vmatprep.subr.bf16.mxu0 0
    %588 = vmatpush1.bf16.msra.mxu0 0
    %589 = vmatprep.subr.bf16.mxu0 0
    %590 = vmatpush1.bf16.msra.mxu0 0
    %591 = vmatprep.subr.bf16.mxu0 0
    %592 = vmatpush1.bf16.msra.mxu0 0
    %593 = vmatprep.subr.bf16.mxu0 0
    %594 = vmatpush1.bf16.msra.mxu0 0
    %595 = vmatprep.mubr.bf16.mxu0 0
    %596 = vmatmul.mubr.bf16.gmra.mrb[0].mxu0 %v272
    %v597 = vpop.f32.mrb[0].mxu0
    %v598 = vadd.f32 %v321, %v597
    %v599 = vpop.f32.mrb[0].mxu0
    %v600 = vadd.f32 %v325, %v599
    %v601 = vpop.f32.mrb[0].mxu0
    %v602 = vadd.f32 %v321, %v601
    %v603 = vpop.f32.mrb[0].mxu0
    %v604 = vadd.f32 %v325, %v603
    %605 = vmatprep.mubr.bf16.mxu0 0
    %606 = vmatmul.mubr.bf16.gmra.mrb[0].mxu0 %v273
    %v607 = vpop.f32.mrb[0].mxu0
    %v608 = vadd.f32 %v321, %v607
    %v609 = vpop.f32.mrb[0].mxu0
    %v610 = vadd.f32 %v325, %v609
    %v611 = vpop.f32.mrb[0].mxu0
    %v612 = vadd.f32 %v321, %v611
    %v613 = vpop.f32.mrb[0].mxu0
    %v614 = vadd.f32 %v325, %v613
    %615 = vmatprep.mubr.bf16.mxu0 0
    %616 = vmatmul.mubr.bf16.gmra.mrb[0].mxu0 %v274
    %v617 = vpop.f32.mrb[0].mxu0
    %v618 = vadd.f32 %v321, %v617
    %v619 = vpop.f32.mrb[0].mxu0
    %v620 = vadd.f32 %v325, %v619
    %v621 = vpop.f32.mrb[0].mxu0
    %v622 = vadd.f32 %v321, %v621
    %v623 = vpop.f32.mrb[0].mxu0
    %v624 = vadd.f32 %v325, %v623
    %625 = vmatprep.mubr.bf16.mxu0 0
    %626 = vmatmul.mubr.bf16.gmra.mrb[0].mxu0 %v275
    %v627 = vpop.f32.mrb[0].mxu0
    %v628 = vadd.f32 %v321, %v627
    %v629 = vpop.f32.mrb[0].mxu0
    %v630 = vadd.f32 %v325, %v629
    %v631 = vpop.f32.mrb[0].mxu0
    %v632 = vadd.f32 %v321, %v631
    %v633 = vpop.f32.mrb[0].mxu0
    %v634 = vadd.f32 %v325, %v633
    %635 = vdwg.mxu0
    %v636 = vld [vmem:[#allocation2] sm:$0xff]
    %v637 = vld [vmem:[#allocation3] sm:$0xff]
    %v638 = vld [vmem:[#allocation4] sm:$0xff]
    %v639 = vpack.c.bf16 %v636, %v636
    %v640 = vld [vmem:[#allocation10] sm:$0xff]
    %v641 = vld [vmem:[#allocation10 + $0x8] sm:$0xff]
    %v642 = vld [vmem:[#allocation10 + $0x10] sm:$0xff]
    %v643 = vld [vmem:[#allocation10 + $0x18] sm:$0xff]
    %v644 = vld [vmem:[#allocation10 + $0x20] sm:$0xff]
    %v645 = vld [vmem:[#allocation10 + $0x28] sm:$0xff]
    %v646 = vld [vmem:[#allocation10 + $0x30] sm:$0xff]
    %v647 = vld [vmem:[#allocation10 + $0x38] sm:$0xff]
    %v648 = vld [vmem:[#allocation10 + $0x40] sm:$0xff]
    %v649 = vld [vmem:[#allocation10 + $0x48] sm:$0xff]
    %v650 = vld [vmem:[#allocation10 + $0x50] sm:$0xff]
    %v651 = vld [vmem:[#allocation10 + $0x58] sm:$0xff]
    %v652 = vld [vmem:[#allocation10 + $0x60] sm:$0xff]
    %v653 = vld [vmem:[#allocation10 + $0x68] sm:$0xff]
    %v654 = vld [vmem:[#allocation10 + $0x70] sm:$0xff]
    %v655 = vld [vmem:[#allocation10 + $0x78] sm:$0xff]
    %v656 = vld [vmem:[#allocation10 + $0x80] sm:$0xff]
    %v657 = vld [vmem:[#allocation10 + $0x88] sm:$0xff]
    %v658 = vld [vmem:[#allocation10 + $0x90] sm:$0xff]
    %v659 = vld [vmem:[#allocation10 + $0x98] sm:$0xff]
    %v660 = vld [vmem:[#allocation10 + $0xa0] sm:$0xff]
    %v661 = vld [vmem:[#allocation10 + $0xa8] sm:$0xff]
    %v662 = vld [vmem:[#allocation10 + $0xb0] sm:$0xff]
    %v663 = vld [vmem:[#allocation10 + $0xb8] sm:$0xff]
    %v664 = vld [vmem:[#allocation10 + $0xc0] sm:$0xff]
    %v665 = vld [vmem:[#allocation10 + $0xc8] sm:$0xff]
    %v666 = vld [vmem:[#allocation10 + $0xd0] sm:$0xff]
    %v667 = vld [vmem:[#allocation10 + $0xd8] sm:$0xff]
    %v668 = vld [vmem:[#allocation10 + $0xe0] sm:$0xff]
    %v669 = vld [vmem:[#allocation10 + $0xe8] sm:$0xff]
    %v670 = vld [vmem:[#allocation10 + $0xf0] sm:$0xff]
    %v671 = vld [vmem:[#allocation10 + $0xf8] sm:$0xff]
    %v704 = vunpack.c.l.b16 %v640
    %v705 = vunpack.c.h.b16 %v640
    %v706 = vunpack.c.l.b16 %v641
    %v707 = vunpack.c.h.b16 %v641
    %v708 = vunpack.c.l.b16 %v642
    %v709 = vunpack.c.h.b16 %v642
    %v710 = vunpack.c.l.b16 %v643
    %v711 = vunpack.c.h.b16 %v643
    %v712 = vunpack.c.l.b16 %v644
    %v713 = vunpack.c.h.b16 %v644
    %v714 = vunpack.c.l.b16 %v645
    %v715 = vunpack.c.h.b16 %v645
    %v716 = vunpack.c.l.b16 %v646
    %v717 = vunpack.c.h.b16 %v646
    %v718 = vunpack.c.l.b16 %v647
    %v719 = vunpack.c.h.b16 %v647
    %v720 = vunpack.c.l.b16 %v648
    %v721 = vunpack.c.h.b16 %v648
    %v722 = vunpack.c.l.b16 %v649
    %v723 = vunpack.c.h.b16 %v649
    %v724 = vunpack.c.l.b16 %v650
    %v725 = vunpack.c.h.b16 %v650
    %v726 = vunpack.c.l.b16 %v651
    %v727 = vunpack.c.h.b16 %v651
    %v728 = vunpack.c.l.b16 %v652
    %v729 = vunpack.c.h.b16 %v652
    %v730 = vunpack.c.l.b16 %v653
    %v731 = vunpack.c.h.b16 %v653
    %v732 = vunpack.c.l.b16 %v654
    %v733 = vunpack.c.h.b16 %v654
    %v734 = vunpack.c.l.b16 %v655
    %v735 = vunpack.c.h.b16 %v655
    %v736 = vunpack.c.l.b16 %v656
    %v737 = vunpack.c.h.b16 %v656
    %v738 = vunpack.c.l.b16 %v657
    %v739 = vunpack.c.h.b16 %v657
    %v740 = vunpack.c.l.b16 %v658
    %v741 = vunpack.c.h.b16 %v658
    %v742 = vunpack.c.l.b16 %v659
    %v743 = vunpack.c.h.b16 %v659
    %v744 = vunpack.c.l.b16 %v660
    %v745 = vunpack.c.h.b16 %v660
    %v746 = vunpack.c.l.b16 %v661
    %v747 = vunpack.c.h.b16 %v661
    %v748 = vunpack.c.l.b16 %v662
    %v749 = vunpack.c.h.b16 %v662
    %v750 = vunpack.c.l.b16 %v663
    %v751 = vunpack.c.h.b16 %v663
    %v752 = vunpack.c.l.b16 %v664
    %v753 = vunpack.c.h.b16 %v664
    %v754 = vunpack.c.l.b16 %v665
    %v755 = vunpack.c.h.b16 %v665
    %v756 = vunpack.c.l.b16 %v666
    %v757 = vunpack.c.h.b16 %v666
    %v758 = vunpack.c.l.b16 %v667
    %v759 = vunpack.c.h.b16 %v667
    %v760 = vunpack.c.l.b16 %v668
    %v761 = vunpack.c.h.b16 %v668
    %v762 = vunpack.c.l.b16 %v669
    %v763 = vunpack.c.h.b16 %v669
    %v764 = vunpack.c.l.b16 %v670
    %v765 = vunpack.c.h.b16 %v670
    %v766 = vunpack.c.l.b16 %v671
    %v767 = vunpack.c.h.b16 %v671
    %v768 = vpack.c.b16 %v708, %v704
    %v769 = vpack.c.b16 %v709, %v705
    %v770 = vpack.c.b16 %v710, %v706
    %v771 = vpack.c.b16 %v711, %v707
    %v772 = vpack.c.b16 %v716, %v712
    %v773 = vpack.c.b16 %v717, %v713
    %v774 = vpack.c.b16 %v718, %v714
    %v775 = vpack.c.b16 %v719, %v715
    %v776 = vpack.c.b16 %v724, %v720
    %v777 = vpack.c.b16 %v725, %v721
    %v778 = vpack.c.b16 %v726, %v722
    %v779 = vpack.c.b16 %v727, %v723
    %v780 = vpack.c.b16 %v732, %v728
    %v781 = vpack.c.b16 %v733, %v729
    %v782 = vpack.c.b16 %v734, %v730
    %v783 = vpack.c.b16 %v735, %v731
    %v784 = vpack.c.b16 %v740, %v736
    %v785 = vpack.c.b16 %v741, %v737
    %v786 = vpack.c.b16 %v742, %v738
    %v787 = vpack.c.b16 %v743, %v739
    %v788 = vpack.c.b16 %v748, %v744
    %v789 = vpack.c.b16 %v749, %v745
    %v790 = vpack.c.b16 %v750, %v746
    %v791 = vpack.c.b16 %v751, %v747
    %v792 = vpack.c.b16 %v756, %v752
    %v793 = vpack.c.b16 %v757, %v753
    %v794 = vpack.c.b16 %v758, %v754
    %v795 = vpack.c.b16 %v759, %v755
    %v796 = vpack.c.b16 %v764, %v760
    %v797 = vpack.c.b16 %v765, %v761
    %v798 = vpack.c.b16 %v766, %v762
    %v799 = vpack.c.b16 %v767, %v763
    %832 = vmatprep.subr.bf16.mxu0 %v769
    %833 = vmatpush1.bf16.msra.mxu0 %v768
    %834 = vmatprep.subr.bf16.mxu0 %v773
    %835 = vmatpush1.bf16.msra.mxu0 %v772
    %836 = vmatprep.subr.bf16.mxu0 %v777
    %837 = vmatpush1.bf16.msra.mxu0 %v776
    %838 = vmatprep.subr.bf16.mxu0 %v781
    %839 = vmatpush1.bf16.msra.mxu0 %v780
    %840 = vmatprep.subr.bf16.mxu0 %v785
    %841 = vmatpush1.bf16.msra.mxu0 %v784
    %842 = vmatprep.subr.bf16.mxu0 %v789
    %843 = vmatpush1.bf16.msra.mxu0 %v788
    %844 = vmatprep.subr.bf16.mxu0 %v793
    %845 = vmatpush1.bf16.msra.mxu0 %v792
    %846 = vmatprep.subr.bf16.mxu0 %v797
    %847 = vmatpush1.bf16.msra.mxu0 %v796
    %848 = vmatprep.subr.bf16.mxu0 0
    %849 = vmatpush1.bf16.msra.mxu0 0
    %850 = vmatprep.subr.bf16.mxu0 0
    %851 = vmatpush1.bf16.msra.mxu0 0
    %852 = vmatprep.subr.bf16.mxu0 0
    %853 = vmatpush1.bf16.msra.mxu0 0
    %854 = vmatprep.subr.bf16.mxu0 0
    %855 = vmatpush1.bf16.msra.mxu0 0
    %856 = vmatprep.subr.bf16.mxu0 0
    %857 = vmatpush1.bf16.msra.mxu0 0
    %858 = vmatprep.subr.bf16.mxu0 0
    %859 = vmatpush1.bf16.msra.mxu0 0
    %860 = vmatprep.subr.bf16.mxu0 0
    %861 = vmatpush1.bf16.msra.mxu0 0
    %862 = vmatprep.subr.bf16.mxu0 0
    %863 = vmatpush1.bf16.msra.mxu0 0
    %864 = vmatprep.mubr.bf16.mxu0 0
    %865 = vmatmul.mubr.bf16.gmra.mrb[0].mxu0 %v639
    %v866 = vpop.f32.mrb[0].mxu0
    %v867 = vadd.f32 0.0, %v866
    %v868 = vpop.f32.mrb[0].mxu0
    %v869 = vadd.f32 0.0, %v868
    %v870 = vpop.f32.mrb[0].mxu0
    %v871 = vpop.f32.mrb[0].mxu0
    %872 = vdwg.mxu0
    %873 = vmatprep.subr.bf16.mxu0 %v771
    %874 = vmatpush1.bf16.msra.mxu0 %v770
    %875 = vmatprep.subr.bf16.mxu0 %v775
    %876 = vmatpush1.bf16.msra.mxu0 %v774
    %877 = vmatprep.subr.bf16.mxu0 %v779
    %878 = vmatpush1.bf16.msra.mxu0 %v778
    %879 = vmatprep.subr.bf16.mxu0 %v783
    %880 = vmatpush1.bf16.msra.mxu0 %v782
    %881 = vmatprep.subr.bf16.mxu0 %v787
    %882 = vmatpush1.bf16.msra.mxu0 %v786
    %883 = vmatprep.subr.bf16.mxu0 %v791
    %884 = vmatpush1.bf16.msra.mxu0 %v790
    %885 = vmatprep.subr.bf16.mxu0 %v795
    %886 = vmatpush1.bf16.msra.mxu0 %v794
    %887 = vmatprep.subr.bf16.mxu0 %v799
    %888 = vmatpush1.bf16.msra.mxu0 %v798
    %889 = vmatprep.subr.bf16.mxu0 0
    %890 = vmatpush1.bf16.msra.mxu0 0
    %891 = vmatprep.subr.bf16.mxu0 0
    %892 = vmatpush1.bf16.msra.mxu0 0
    %893 = vmatprep.subr.bf16.mxu0 0
    %894 = vmatpush1.bf16.msra.mxu0 0
    %895 = vmatprep.subr.bf16.mxu0 0
    %896 = vmatpush1.bf16.msra.mxu0 0
    %897 = vmatprep.subr.bf16.mxu0 0
    %898 = vmatpush1.bf16.msra.mxu0 0
    %899 = vmatprep.subr.bf16.mxu0 0
    %900 = vmatpush1.bf16.msra.mxu0 0
    %901 = vmatprep.subr.bf16.mxu0 0
    %902 = vmatpush1.bf16.msra.mxu0 0
    %903 = vmatprep.subr.bf16.mxu0 0
    %904 = vmatpush1.bf16.msra.mxu0 0
    %905 = vmatprep.mubr.bf16.mxu0 0
    %906 = vmatmul.mubr.bf16.gmra.mrb[0].mxu0 %v639
    %v907 = vpop.f32.mrb[0].mxu0
    %v908 = vadd.f32 0.0, %v907
    %v909 = vpop.f32.mrb[0].mxu0
    %v910 = vadd.f32 0.0, %v909
    %v911 = vpop.f32.mrb[0].mxu0
    %v912 = vpop.f32.mrb[0].mxu0
    %913 = vdwg.mxu0
    %v914 = vadd.f32 %v525, %v867
    %v915 = vadd.f32 %v527, %v869
    %v916 = vadd.f32 %v598, %v908
    %v917 = vadd.f32 %v600, %v910
    %v918 = vxor.u32 %v914, 2147483648
    %v919 = vmul.f32 %v918, 1.442695
    %v920 = vpow.pop %v919
    %v921 = vadd.f32 %v920, 1.0
    %v922 = vrcp.pop %v921
    %v923 = vmul.f32 1.0, %v922
    %v924 = vxor.u32 %v915, 2147483648
    %v925 = vmul.f32 %v924, 1.442695
    %v926 = vpow.pop %v925
    %v927 = vadd.f32 %v926, 1.0
    %v928 = vrcp.pop %v927
    %v929 = vmul.f32 1.0, %v928
    %v930 = vtanh.pop %v916
    %v931 = vxor.u32 %v917, 2147483648
    %v932 = vmul.f32 %v931, 1.442695
    %v933 = vpow.pop %v932
    %v934 = vadd.f32 %v933, 1.0
    %v935 = vrcp.pop %v934
    %v936 = vmul.f32 1.0, %v935
    %v937 = vmul.f32 %v929, %v637
    %v938 = vmul.f32 %v923, %v930
    %v939 = vadd.f32 %v937, %v938
    %v940 = vtanh.pop %v939
    %v941 = vmul.f32 %v936, %v940
    %v942 = vld [vmem:[%s1] sm:$0xff]
    %944 = vset.pattern.permute.xlu0 0
    %945 = vperm.xlu0 %944, %v942
    %v946 = vpop.permute.xlu0 %945
    %v948 = vmul.f32 %v941, %v946
    %v949 = vadd.f32 %v638, %v948
    %v950 = vpack.c.bf16 %v941, %v941
    %951 = vmatprep.subr.bf16.mxu0 %v769
    %952 = vmatpush1.bf16.msra.mxu0 %v768
    %953 = vmatprep.subr.bf16.mxu0 %v773
    %954 = vmatpush1.bf16.msra.mxu0 %v772
    %955 = vmatprep.subr.bf16.mxu0 %v777
    %956 = vmatpush1.bf16.msra.mxu0 %v776
    %957 = vmatprep.subr.bf16.mxu0 %v781
    %958 = vmatpush1.bf16.msra.mxu0 %v780
    %959 = vmatprep.subr.bf16.mxu0 %v785
    %960 = vmatpush1.bf16.msra.mxu0 %v784
    %961 = vmatprep.subr.bf16.mxu0 %v789
    %962 = vmatpush1.bf16.msra.mxu0 %v788
    %963 = vmatprep.subr.bf16.mxu0 %v793
    %964 = vmatpush1.bf16.msra.mxu0 %v792
    %965 = vmatprep.subr.bf16.mxu0 %v797
    %966 = vmatpush1.bf16.msra.mxu0 %v796
    %967 = vmatprep.subr.bf16.mxu0 0
    %968 = vmatpush1.bf16.msra.mxu0 0
    %969 = vmatprep.subr.bf16.mxu0 0
    %970 = vmatpush1.bf16.msra.mxu0 0
    %971 = vmatprep.subr.bf16.mxu0 0
    %972 = vmatpush1.bf16.msra.mxu0 0
    %973 = vmatprep.subr.bf16.mxu0 0
    %974 = vmatpush1.bf16.msra.mxu0 0
    %975 = vmatprep.subr.bf16.mxu0 0
    %976 = vmatpush1.bf16.msra.mxu0 0
    %977 = vmatprep.subr.bf16.mxu0 0
    %978 = vmatpush1.bf16.msra.mxu0 0
    %979 = vmatprep.subr.bf16.mxu0 0
    %980 = vmatpush1.bf16.msra.mxu0 0
    %981 = vmatprep.subr.bf16.mxu0 0
    %982 = vmatpush1.bf16.msra.mxu0 0
    %983 = vmatprep.mubr.bf16.mxu0 0
    %984 = vmatmul.mubr.bf16.gmra.mrb[0].mxu0 %v950
    %v985 = vpop.f32.mrb[0].mxu0
    %v986 = vadd.f32 0.0, %v985
    %v987 = vpop.f32.mrb[0].mxu0
    %v988 = vadd.f32 0.0, %v987
    %v989 = vpop.f32.mrb[0].mxu0
    %v990 = vpop.f32.mrb[0].mxu0
    %991 = vdwg.mxu0
    %992 = vmatprep.subr.bf16.mxu0 %v771
    %993 = vmatpush1.bf16.msra.mxu0 %v770
    %994 = vmatprep.subr.bf16.mxu0 %v775
    %995 = vmatpush1.bf16.msra.mxu0 %v774
    %996 = vmatprep.subr.bf16.mxu0 %v779
    %997 = vmatpush1.bf16.msra.mxu0 %v778
    %998 = vmatprep.subr.bf16.mxu0 %v783
    %999 = vmatpush1.bf16.msra.mxu0 %v782
    %1000 = vmatprep.subr.bf16.mxu0 %v787
    %1001 = vmatpush1.bf16.msra.mxu0 %v786
    %1002 = vmatprep.subr.bf16.mxu0 %v791
    %1003 = vmatpush1.bf16.msra.mxu0 %v790
    %1004 = vmatprep.subr.bf16.mxu0 %v795
    %1005 = vmatpush1.bf16.msra.mxu0 %v794
    %1006 = vmatprep.subr.bf16.mxu0 %v799
    %1007 = vmatpush1.bf16.msra.mxu0 %v798
    %1008 = vmatprep.subr.bf16.mxu0 0
    %1009 = vmatpush1.bf16.msra.mxu0 0
    %1010 = vmatprep.subr.bf16.mxu0 0
    %1011 = vmatpush1.bf16.msra.mxu0 0
    %1012 = vmatprep.subr.bf16.mxu0 0
    %1013 = vmatpush1.bf16.msra.mxu0 0
    %1014 = vmatprep.subr.bf16.mxu0 0
    %1015 = vmatpush1.bf16.msra.mxu0 0
    %1016 = vmatprep.subr.bf16.mxu0 0
    %1017 = vmatpush1.bf16.msra.mxu0 0
    %1018 = vmatprep.subr.bf16.mxu0 0
    %1019 = vmatpush1.bf16.msra.mxu0 0
    %1020 = vmatprep.subr.bf16.mxu0 0
    %1021 = vmatpush1.bf16.msra.mxu0 0
    %1022 = vmatprep.subr.bf16.mxu0 0
    %1023 = vmatpush1.bf16.msra.mxu0 0
    %1024 = vmatprep.mubr.bf16.mxu0 0
    %1025 = vmatmul.mubr.bf16.gmra.mrb[0].mxu0 %v950
    %v1026 = vpop.f32.mrb[0].mxu0
    %v1027 = vadd.f32 0.0, %v1026
    %v1028 = vpop.f32.mrb[0].mxu0
    %v1029 = vadd.f32 0.0, %v1028
    %v1030 = vpop.f32.mrb[0].mxu0
    %v1031 = vpop.f32.mrb[0].mxu0
    %1032 = vdwg.mxu0
    %v1033 = vadd.f32 %v529, %v986
    %v1034 = vadd.f32 %v531, %v988
    %v1035 = vadd.f32 %v602, %v1027
    %v1036 = vadd.f32 %v604, %v1029
    %v1037 = vxor.u32 %v1033, 2147483648
    %v1038 = vmul.f32 %v1037, 1.442695
    %v1039 = vpow.pop %v1038
    %v1040 = vadd.f32 %v1039, 1.0
    %v1041 = vrcp.pop %v1040
    %v1042 = vmul.f32 1.0, %v1041
    %v1043 = vxor.u32 %v1034, 2147483648
    %v1044 = vmul.f32 %v1043, 1.442695
    %v1045 = vpow.pop %v1044
    %v1046 = vadd.f32 %v1045, 1.0
    %v1047 = vrcp.pop %v1046
    %v1048 = vmul.f32 1.0, %v1047
    %v1049 = vtanh.pop %v1035
    %v1050 = vxor.u32 %v1036, 2147483648
    %v1051 = vmul.f32 %v1050, 1.442695
    %v1052 = vpow.pop %v1051
    %v1053 = vadd.f32 %v1052, 1.0
    %v1054 = vrcp.pop %v1053
    %v1055 = vmul.f32 1.0, %v1054
    %v1056 = vmul.f32 %v1048, %v939
    %v1057 = vmul.f32 %v1042, %v1049
    %v1058 = vadd.f32 %v1056, %v1057
    %v1059 = vtanh.pop %v1058
    %v1060 = vmul.f32 %v1055, %v1059
    %s1061 = scalar_lea.vmem %s1, 8
    %v1062 = vld [vmem:[%s1061] sm:$0xff]
    %1064 = vset.pattern.permute.xlu0 0
    %1065 = vperm.xlu0 %1064, %v1062
    %v1066 = vpop.permute.xlu0 %1065
    %v1068 = vmul.f32 %v1060, %v1066
    %v1069 = vadd.f32 %v949, %v1068
    %v1070 = vpack.c.bf16 %v1060, %v1060
    %1071 = vmatprep.subr.bf16.mxu0 %v769
    %1072 = vmatpush1.bf16.msra.mxu0 %v768
    %1073 = vmatprep.subr.bf16.mxu0 %v773
    %1074 = vmatpush1.bf16.msra.mxu0 %v772
    %1075 = vmatprep.subr.bf16.mxu0 %v777
    %1076 = vmatpush1.bf16.msra.mxu0 %v776
    %1077 = vmatprep.subr.bf16.mxu0 %v781
    %1078 = vmatpush1.bf16.msra.mxu0 %v780
    %1079 = vmatprep.subr.bf16.mxu0 %v785
    %1080 = vmatpush1.bf16.msra.mxu0 %v784
    %1081 = vmatprep.subr.bf16.mxu0 %v789
    %1082 = vmatpush1.bf16.msra.mxu0 %v788
    %1083 = vmatprep.subr.bf16.mxu0 %v793
    %1084 = vmatpush1.bf16.msra.mxu0 %v792
    %1085 = vmatprep.subr.bf16.mxu0 %v797
    %1086 = vmatpush1.bf16.msra.mxu0 %v796
    %1087 = vmatprep.subr.bf16.mxu0 0
    %1088 = vmatpush1.bf16.msra.mxu0 0
    %1089 = vmatprep.subr.bf16.mxu0 0
    %1090 = vmatpush1.bf16.msra.mxu0 0
    %1091 = vmatprep.subr.bf16.mxu0 0
    %1092 = vmatpush1.bf16.msra.mxu0 0
    %1093 = vmatprep.subr.bf16.mxu0 0
    %1094 = vmatpush1.bf16.msra.mxu0 0
    %1095 = vmatprep.subr.bf16.mxu0 0
    %1096 = vmatpush1.bf16.msra.mxu0 0
    %1097 = vmatprep.subr.bf16.mxu0 0
    %1098 = vmatpush1.bf16.msra.mxu0 0
    %1099 = vmatprep.subr.bf16.mxu0 0
    %1100 = vmatpush1.bf16.msra.mxu0 0
    %1101 = vmatprep.subr.bf16.mxu0 0
    %1102 = vmatpush1.bf16.msra.mxu0 0
    %1103 = vmatprep.mubr.bf16.mxu0 0
    %1104 = vmatmul.mubr.bf16.gmra.mrb[0].mxu0 %v1070
    %v1105 = vpop.f32.mrb[0].mxu0
    %v1106 = vadd.f32 0.0, %v1105
    %v1107 = vpop.f32.mrb[0].mxu0
    %v1108 = vadd.f32 0.0, %v1107
    %v1109 = vpop.f32.mrb[0].mxu0
    %v1110 = vpop.f32.mrb[0].mxu0
    %1111 = vdwg.mxu0
    %1112 = vmatprep.subr.bf16.mxu0 %v771
    %1113 = vmatpush1.bf16.msra.mxu0 %v770
    %1114 = vmatprep.subr.bf16.mxu0 %v775
    %1115 = vmatpush1.bf16.msra.mxu0 %v774
    %1116 = vmatprep.subr.bf16.mxu0 %v779
    %1117 = vmatpush1.bf16.msra.mxu0 %v778
    %1118 = vmatprep.subr.bf16.mxu0 %v783
    %1119 = vmatpush1.bf16.msra.mxu0 %v782
    %1120 = vmatprep.subr.bf16.mxu0 %v787
    %1121 = vmatpush1.bf16.msra.mxu0 %v786
    %1122 = vmatprep.subr.bf16.mxu0 %v791
    %1123 = vmatpush1.bf16.msra.mxu0 %v790
    %1124 = vmatprep.subr.bf16.mxu0 %v795
    %1125 = vmatpush1.bf16.msra.mxu0 %v794
    %1126 = vmatprep.subr.bf16.mxu0 %v799
    %1127 = vmatpush1.bf16.msra.mxu0 %v798
    %1128 = vmatprep.subr.bf16.mxu0 0
    %1129 = vmatpush1.bf16.msra.mxu0 0
    %1130 = vmatprep.subr.bf16.mxu0 0
    %1131 = vmatpush1.bf16.msra.mxu0 0
    %1132 = vmatprep.subr.bf16.mxu0 0
    %1133 = vmatpush1.bf16.msra.mxu0 0
    %1134 = vmatprep.subr.bf16.mxu0 0
    %1135 = vmatpush1.bf16.msra.mxu0 0
    %1136 = vmatprep.subr.bf16.mxu0 0
    %1137 = vmatpush1.bf16.msra.mxu0 0
    %1138 = vmatprep.subr.bf16.mxu0 0
    %1139 = vmatpush1.bf16.msra.mxu0 0
    %1140 = vmatprep.subr.bf16.mxu0 0
    %1141 = vmatpush1.bf16.msra.mxu0 0
    %1142 = vmatprep.subr.bf16.mxu0 0
    %1143 = vmatpush1.bf16.msra.mxu0 0
    %1144 = vmatprep.mubr.bf16.mxu0 0
    %1145 = vmatmul.mubr.bf16.gmra.mrb[0].mxu0 %v1070
    %v1146 = vpop.f32.mrb[0].mxu0
    %v1147 = vadd.f32 0.0, %v1146
    %v1148 = vpop.f32.mrb[0].mxu0
    %v1149 = vadd.f32 0.0, %v1148
    %v1150 = vpop.f32.mrb[0].mxu0
    %v1151 = vpop.f32.mrb[0].mxu0
    %1152 = vdwg.mxu0
    %v1153 = vadd.f32 %v535, %v1106
    %v1154 = vadd.f32 %v537, %v1108
    %v1155 = vadd.f32 %v608, %v1147
    %v1156 = vadd.f32 %v610, %v1149
    %v1157 = vxor.u32 %v1153, 2147483648
    %v1158 = vmul.f32 %v1157, 1.442695
    %v1159 = vpow.pop %v1158
    %v1160 = vadd.f32 %v1159, 1.0
    %v1161 = vrcp.pop %v1160
    %v1162 = vmul.f32 1.0, %v1161
    %v1163 = vxor.u32 %v1154, 2147483648
    %v1164 = vmul.f32 %v1163, 1.442695
    %v1165 = vpow.pop %v1164
    %v1166 = vadd.f32 %v1165, 1.0
    %v1167 = vrcp.pop %v1166
    %v1168 = vmul.f32 1.0, %v1167
    %v1169 = vtanh.pop %v1155
    %v1170 = vxor.u32 %v1156, 2147483648
    %v1171 = vmul.f32 %v1170, 1.442695
    %v1172 = vpow.pop %v1171
    %v1173 = vadd.f32 %v1172, 1.0
    %v1174 = vrcp.pop %v1173
    %v1175 = vmul.f32 1.0, %v1174
    %v1176 = vmul.f32 %v1168, %v1058
    %v1177 = vmul.f32 %v1162, %v1169
    %v1178 = vadd.f32 %v1176, %v1177
    %v1179 = vtanh.pop %v1178
    %v1180 = vmul.f32 %v1175, %v1179
    %s1181 = scalar_lea.vmem %s1, 16
    %v1182 = vld [vmem:[%s1181] sm:$0xff]
    %1184 = vset.pattern.permute.xlu0 0
    %1185 = vperm.xlu0 %1184, %v1182
    %v1186 = vpop.permute.xlu0 %1185
    %v1188 = vmul.f32 %v1180, %v1186
    %v1189 = vadd.f32 %v1069, %v1188
    %v1190 = vpack.c.bf16 %v1180, %v1180
    %1191 = vmatprep.subr.bf16.mxu0 %v769
    %1192 = vmatpush1.bf16.msra.mxu0 %v768
    %1193 = vmatprep.subr.bf16.mxu0 %v773
    %1194 = vmatpush1.bf16.msra.mxu0 %v772
    %1195 = vmatprep.subr.bf16.mxu0 %v777
    %1196 = vmatpush1.bf16.msra.mxu0 %v776
    %1197 = vmatprep.subr.bf16.mxu0 %v781
    %1198 = vmatpush1.bf16.msra.mxu0 %v780
    %1199 = vmatprep.subr.bf16.mxu0 %v785
    %1200 = vmatpush1.bf16.msra.mxu0 %v784
    %1201 = vmatprep.subr.bf16.mxu0 %v789
    %1202 = vmatpush1.bf16.msra.mxu0 %v788
    %1203 = vmatprep.subr.bf16.mxu0 %v793
    %1204 = vmatpush1.bf16.msra.mxu0 %v792
    %1205 = vmatprep.subr.bf16.mxu0 %v797
    %1206 = vmatpush1.bf16.msra.mxu0 %v796
    %1207 = vmatprep.subr.bf16.mxu0 0
    %1208 = vmatpush1.bf16.msra.mxu0 0
    %1209 = vmatprep.subr.bf16.mxu0 0
    %1210 = vmatpush1.bf16.msra.mxu0 0
    %1211 = vmatprep.subr.bf16.mxu0 0
    %1212 = vmatpush1.bf16.msra.mxu0 0
    %1213 = vmatprep.subr.bf16.mxu0 0
    %1214 = vmatpush1.bf16.msra.mxu0 0
    %1215 = vmatprep.subr.bf16.mxu0 0
    %1216 = vmatpush1.bf16.msra.mxu0 0
    %1217 = vmatprep.subr.bf16.mxu0 0
    %1218 = vmatpush1.bf16.msra.mxu0 0
    %1219 = vmatprep.subr.bf16.mxu0 0
    %1220 = vmatpush1.bf16.msra.mxu0 0
    %1221 = vmatprep.subr.bf16.mxu0 0
    %1222 = vmatpush1.bf16.msra.mxu0 0
    %1223 = vmatprep.mubr.bf16.mxu0 0
    %1224 = vmatmul.mubr.bf16.gmra.mrb[0].mxu0 %v1190
    %v1225 = vpop.f32.mrb[0].mxu0
    %v1226 = vadd.f32 0.0, %v1225
    %v1227 = vpop.f32.mrb[0].mxu0
    %v1228 = vadd.f32 0.0, %v1227
    %v1229 = vpop.f32.mrb[0].mxu0
    %v1230 = vpop.f32.mrb[0].mxu0
    %1231 = vdwg.mxu0
    %1232 = vmatprep.subr.bf16.mxu0 %v771
    %1233 = vmatpush1.bf16.msra.mxu0 %v770
    %1234 = vmatprep.subr.bf16.mxu0 %v775
    %1235 = vmatpush1.bf16.msra.mxu0 %v774
    %1236 = vmatprep.subr.bf16.mxu0 %v779
    %1237 = vmatpush1.bf16.msra.mxu0 %v778
    %1238 = vmatprep.subr.bf16.mxu0 %v783
    %1239 = vmatpush1.bf16.msra.mxu0 %v782
    %1240 = vmatprep.subr.bf16.mxu0 %v787
    %1241 = vmatpush1.bf16.msra.mxu0 %v786
    %1242 = vmatprep.subr.bf16.mxu0 %v791
    %1243 = vmatpush1.bf16.msra.mxu0 %v790
    %1244 = vmatprep.subr.bf16.mxu0 %v795
    %1245 = vmatpush1.bf16.msra.mxu0 %v794
    %1246 = vmatprep.subr.bf16.mxu0 %v799
    %1247 = vmatpush1.bf16.msra.mxu0 %v798
    %1248 = vmatprep.subr.bf16.mxu0 0
    %1249 = vmatpush1.bf16.msra.mxu0 0
    %1250 = vmatprep.subr.bf16.mxu0 0
    %1251 = vmatpush1.bf16.msra.mxu0 0
    %1252 = vmatprep.subr.bf16.mxu0 0
    %1253 = vmatpush1.bf16.msra.mxu0 0
    %1254 = vmatprep.subr.bf16.mxu0 0
    %1255 = vmatpush1.bf16.msra.mxu0 0
    %1256 = vmatprep.subr.bf16.mxu0 0
    %1257 = vmatpush1.bf16.msra.mxu0 0
    %1258 = vmatprep.subr.bf16.mxu0 0
    %1259 = vmatpush1.bf16.msra.mxu0 0
    %1260 = vmatprep.subr.bf16.mxu0 0
    %1261 = vmatpush1.bf16.msra.mxu0 0
    %1262 = vmatprep.subr.bf16.mxu0 0
    %1263 = vmatpush1.bf16.msra.mxu0 0
    %1264 = vmatprep.mubr.bf16.mxu0 0
    %1265 = vmatmul.mubr.bf16.gmra.mrb[0].mxu0 %v1190
    %v1266 = vpop.f32.mrb[0].mxu0
    %v1267 = vadd.f32 0.0, %v1266
    %v1268 = vpop.f32.mrb[0].mxu0
    %v1269 = vadd.f32 0.0, %v1268
    %v1270 = vpop.f32.mrb[0].mxu0
    %v1271 = vpop.f32.mrb[0].mxu0
    %1272 = vdwg.mxu0
    %v1273 = vadd.f32 %v539, %v1226
    %v1274 = vadd.f32 %v541, %v1228
    %v1275 = vadd.f32 %v612, %v1267
    %v1276 = vadd.f32 %v614, %v1269
    %v1277 = vxor.u32 %v1273, 2147483648
    %v1278 = vmul.f32 %v1277, 1.442695
    %v1279 = vpow.pop %v1278
    %v1280 = vadd.f32 %v1279, 1.0
    %v1281 = vrcp.pop %v1280
    %v1282 = vmul.f32 1.0, %v1281
    %v1283 = vxor.u32 %v1274, 2147483648
    %v1284 = vmul.f32 %v1283, 1.442695
    %v1285 = vpow.pop %v1284
    %v1286 = vadd.f32 %v1285, 1.0
    %v1287 = vrcp.pop %v1286
    %v1288 = vmul.f32 1.0, %v1287
    %v1289 = vtanh.pop %v1275
    %v1290 = vxor.u32 %v1276, 2147483648
    %v1291 = vmul.f32 %v1290, 1.442695
    %v1292 = vpow.pop %v1291
    %v1293 = vadd.f32 %v1292, 1.0
    %v1294 = vrcp.pop %v1293
    %v1295 = vmul.f32 1.0, %v1294
    %v1296 = vmul.f32 %v1288, %v1178
    %v1297 = vmul.f32 %v1282, %v1289
    %v1298 = vadd.f32 %v1296, %v1297
    %v1299 = vtanh.pop %v1298
    %v1300 = vmul.f32 %v1295, %v1299
    %s1301 = scalar_lea.vmem %s1, 24
    %v1302 = vld [vmem:[%s1301] sm:$0xff]
    %1304 = vset.pattern.permute.xlu0 0
    %1305 = vperm.xlu0 %1304, %v1302
    %v1306 = vpop.permute.xlu0 %1305
    %v1308 = vmul.f32 %v1300, %v1306
    %v1309 = vadd.f32 %v1189, %v1308
    %v1310 = vpack.c.bf16 %v1300, %v1300
    %1311 = vmatprep.subr.bf16.mxu0 %v769
    %1312 = vmatpush1.bf16.msra.mxu0 %v768
    %1313 = vmatprep.subr.bf16.mxu0 %v773
    %1314 = vmatpush1.bf16.msra.mxu0 %v772
    %1315 = vmatprep.subr.bf16.mxu0 %v777
    %1316 = vmatpush1.bf16.msra.mxu0 %v776
    %1317 = vmatprep.subr.bf16.mxu0 %v781
    %1318 = vmatpush1.bf16.msra.mxu0 %v780
    %1319 = vmatprep.subr.bf16.mxu0 %v785
    %1320 = vmatpush1.bf16.msra.mxu0 %v784
    %1321 = vmatprep.subr.bf16.mxu0 %v789
    %1322 = vmatpush1.bf16.msra.mxu0 %v788
    %1323 = vmatprep.subr.bf16.mxu0 %v793
    %1324 = vmatpush1.bf16.msra.mxu0 %v792
    %1325 = vmatprep.subr.bf16.mxu0 %v797
    %1326 = vmatpush1.bf16.msra.mxu0 %v796
    %1327 = vmatprep.subr.bf16.mxu0 0
    %1328 = vmatpush1.bf16.msra.mxu0 0
    %1329 = vmatprep.subr.bf16.mxu0 0
    %1330 = vmatpush1.bf16.msra.mxu0 0
    %1331 = vmatprep.subr.bf16.mxu0 0
    %1332 = vmatpush1.bf16.msra.mxu0 0
    %1333 = vmatprep.subr.bf16.mxu0 0
    %1334 = vmatpush1.bf16.msra.mxu0 0
    %1335 = vmatprep.subr.bf16.mxu0 0
    %1336 = vmatpush1.bf16.msra.mxu0 0
    %1337 = vmatprep.subr.bf16.mxu0 0
    %1338 = vmatpush1.bf16.msra.mxu0 0
    %1339 = vmatprep.subr.bf16.mxu0 0
    %1340 = vmatpush1.bf16.msra.mxu0 0
    %1341 = vmatprep.subr.bf16.mxu0 0
    %1342 = vmatpush1.bf16.msra.mxu0 0
    %1343 = vmatprep.mubr.bf16.mxu0 0
    %1344 = vmatmul.mubr.bf16.gmra.mrb[0].mxu0 %v1310
    %v1345 = vpop.f32.mrb[0].mxu0
    %v1346 = vadd.f32 0.0, %v1345
    %v1347 = vpop.f32.mrb[0].mxu0
    %v1348 = vadd.f32 0.0, %v1347
    %v1349 = vpop.f32.mrb[0].mxu0
    %v1350 = vpop.f32.mrb[0].mxu0
    %1351 = vdwg.mxu0
    %1352 = vmatprep.subr.bf16.mxu0 %v771
    %1353 = vmatpush1.bf16.msra.mxu0 %v770
    %1354 = vmatprep.subr.bf16.mxu0 %v775
    %1355 = vmatpush1.bf16.msra.mxu0 %v774
    %1356 = vmatprep.subr.bf16.mxu0 %v779
    %1357 = vmatpush1.bf16.msra.mxu0 %v778
    %1358 = vmatprep.subr.bf16.mxu0 %v783
    %1359 = vmatpush1.bf16.msra.mxu0 %v782
    %1360 = vmatprep.subr.bf16.mxu0 %v787
    %1361 = vmatpush1.bf16.msra.mxu0 %v786
    %1362 = vmatprep.subr.bf16.mxu0 %v791
    %1363 = vmatpush1.bf16.msra.mxu0 %v790
    %1364 = vmatprep.subr.bf16.mxu0 %v795
    %1365 = vmatpush1.bf16.msra.mxu0 %v794
    %1366 = vmatprep.subr.bf16.mxu0 %v799
    %1367 = vmatpush1.bf16.msra.mxu0 %v798
    %1368 = vmatprep.subr.bf16.mxu0 0
    %1369 = vmatpush1.bf16.msra.mxu0 0
    %1370 = vmatprep.subr.bf16.mxu0 0
    %1371 = vmatpush1.bf16.msra.mxu0 0
    %1372 = vmatprep.subr.bf16.mxu0 0
    %1373 = vmatpush1.bf16.msra.mxu0 0
    %1374 = vmatprep.subr.bf16.mxu0 0
    %1375 = vmatpush1.bf16.msra.mxu0 0
    %1376 = vmatprep.subr.bf16.mxu0 0
    %1377 = vmatpush1.bf16.msra.mxu0 0
    %1378 = vmatprep.subr.bf16.mxu0 0
    %1379 = vmatpush1.bf16.msra.mxu0 0
    %1380 = vmatprep.subr.bf16.mxu0 0
    %1381 = vmatpush1.bf16.msra.mxu0 0
    %1382 = vmatprep.subr.bf16.mxu0 0
    %1383 = vmatpush1.bf16.msra.mxu0 0
    %1384 = vmatprep.mubr.bf16.mxu0 0
    %1385 = vmatmul.mubr.bf16.gmra.mrb[0].mxu0 %v1310
    %v1386 = vpop.f32.mrb[0].mxu0
    %v1387 = vadd.f32 0.0, %v1386
    %v1388 = vpop.f32.mrb[0].mxu0
    %v1389 = vadd.f32 0.0, %v1388
    %v1390 = vpop.f32.mrb[0].mxu0
    %v1391 = vpop.f32.mrb[0].mxu0
    %1392 = vdwg.mxu0
    %v1393 = vadd.f32 %v545, %v1346
    %v1394 = vadd.f32 %v547, %v1348
    %v1395 = vadd.f32 %v618, %v1387
    %v1396 = vadd.f32 %v620, %v1389
    %v1397 = vxor.u32 %v1393, 2147483648
    %v1398 = vmul.f32 %v1397, 1.442695
    %v1399 = vpow.pop %v1398
    %v1400 = vadd.f32 %v1399, 1.0
    %v1401 = vrcp.pop %v1400
    %v1402 = vmul.f32 1.0, %v1401
    %v1403 = vxor.u32 %v1394, 2147483648
    %v1404 = vmul.f32 %v1403, 1.442695
    %v1405 = vpow.pop %v1404
    %v1406 = vadd.f32 %v1405, 1.0
    %v1407 = vrcp.pop %v1406
    %v1408 = vmul.f32 1.0, %v1407
    %v1409 = vtanh.pop %v1395
    %v1410 = vxor.u32 %v1396, 2147483648
    %v1411 = vmul.f32 %v1410, 1.442695
    %v1412 = vpow.pop %v1411
    %v1413 = vadd.f32 %v1412, 1.0
    %v1414 = vrcp.pop %v1413
    %v1415 = vmul.f32 1.0, %v1414
    %v1416 = vmul.f32 %v1408, %v1298
    %v1417 = vmul.f32 %v1402, %v1409
    %v1418 = vadd.f32 %v1416, %v1417
    %v1419 = vtanh.pop %v1418
    %v1420 = vmul.f32 %v1415, %v1419
    %s1421 = scalar_lea.vmem %s1, 32
    %v1422 = vld [vmem:[%s1421] sm:$0xff]
    %1424 = vset.pattern.permute.xlu0 0
    %1425 = vperm.xlu0 %1424, %v1422
    %v1426 = vpop.permute.xlu0 %1425
    %v1428 = vmul.f32 %v1420, %v1426
    %v1429 = vadd.f32 %v1309, %v1428
    %v1430 = vpack.c.bf16 %v1420, %v1420
    %1431 = vmatprep.subr.bf16.mxu0 %v769
    %1432 = vmatpush1.bf16.msra.mxu0 %v768
    %1433 = vmatprep.subr.bf16.mxu0 %v773
    %1434 = vmatpush1.bf16.msra.mxu0 %v772
    %1435 = vmatprep.subr.bf16.mxu0 %v777
    %1436 = vmatpush1.bf16.msra.mxu0 %v776
    %1437 = vmatprep.subr.bf16.mxu0 %v781
    %1438 = vmatpush1.bf16.msra.mxu0 %v780
    %1439 = vmatprep.subr.bf16.mxu0 %v785
    %1440 = vmatpush1.bf16.msra.mxu0 %v784
    %1441 = vmatprep.subr.bf16.mxu0 %v789
    %1442 = vmatpush1.bf16.msra.mxu0 %v788
    %1443 = vmatprep.subr.bf16.mxu0 %v793
    %1444 = vmatpush1.bf16.msra.mxu0 %v792
    %1445 = vmatprep.subr.bf16.mxu0 %v797
    %1446 = vmatpush1.bf16.msra.mxu0 %v796
    %1447 = vmatprep.subr.bf16.mxu0 0
    %1448 = vmatpush1.bf16.msra.mxu0 0
    %1449 = vmatprep.subr.bf16.mxu0 0
    %1450 = vmatpush1.bf16.msra.mxu0 0
    %1451 = vmatprep.subr.bf16.mxu0 0
    %1452 = vmatpush1.bf16.msra.mxu0 0
    %1453 = vmatprep.subr.bf16.mxu0 0
    %1454 = vmatpush1.bf16.msra.mxu0 0
    %1455 = vmatprep.subr.bf16.mxu0 0
    %1456 = vmatpush1.bf16.msra.mxu0 0
    %1457 = vmatprep.subr.bf16.mxu0 0
    %1458 = vmatpush1.bf16.msra.mxu0 0
    %1459 = vmatprep.subr.bf16.mxu0 0
    %1460 = vmatpush1.bf16.msra.mxu0 0
    %1461 = vmatprep.subr.bf16.mxu0 0
    %1462 = vmatpush1.bf16.msra.mxu0 0
    %1463 = vmatprep.mubr.bf16.mxu0 0
    %1464 = vmatmul.mubr.bf16.gmra.mrb[0].mxu0 %v1430
    %v1465 = vpop.f32.mrb[0].mxu0
    %v1466 = vadd.f32 0.0, %v1465
    %v1467 = vpop.f32.mrb[0].mxu0
    %v1468 = vadd.f32 0.0, %v1467
    %v1469 = vpop.f32.mrb[0].mxu0
    %v1470 = vpop.f32.mrb[0].mxu0
    %1471 = vdwg.mxu0
    %1472 = vmatprep.subr.bf16.mxu0 %v771
    %1473 = vmatpush1.bf16.msra.mxu0 %v770
    %1474 = vmatprep.subr.bf16.mxu0 %v775
    %1475 = vmatpush1.bf16.msra.mxu0 %v774
    %1476 = vmatprep.subr.bf16.mxu0 %v779
    %1477 = vmatpush1.bf16.msra.mxu0 %v778
    %1478 = vmatprep.subr.bf16.mxu0 %v783
    %1479 = vmatpush1.bf16.msra.mxu0 %v782
    %1480 = vmatprep.subr.bf16.mxu0 %v787
    %1481 = vmatpush1.bf16.msra.mxu0 %v786
    %1482 = vmatprep.subr.bf16.mxu0 %v791
    %1483 = vmatpush1.bf16.msra.mxu0 %v790
    %1484 = vmatprep.subr.bf16.mxu0 %v795
    %1485 = vmatpush1.bf16.msra.mxu0 %v794
    %1486 = vmatprep.subr.bf16.mxu0 %v799
    %1487 = vmatpush1.bf16.msra.mxu0 %v798
    %1488 = vmatprep.subr.bf16.mxu0 0
    %1489 = vmatpush1.bf16.msra.mxu0 0
    %1490 = vmatprep.subr.bf16.mxu0 0
    %1491 = vmatpush1.bf16.msra.mxu0 0
    %1492 = vmatprep.subr.bf16.mxu0 0
    %1493 = vmatpush1.bf16.msra.mxu0 0
    %1494 = vmatprep.subr.bf16.mxu0 0
    %1495 = vmatpush1.bf16.msra.mxu0 0
    %1496 = vmatprep.subr.bf16.mxu0 0
    %1497 = vmatpush1.bf16.msra.mxu0 0
    %1498 = vmatprep.subr.bf16.mxu0 0
    %1499 = vmatpush1.bf16.msra.mxu0 0
    %1500 = vmatprep.subr.bf16.mxu0 0
    %1501 = vmatpush1.bf16.msra.mxu0 0
    %1502 = vmatprep.subr.bf16.mxu0 0
    %1503 = vmatpush1.bf16.msra.mxu0 0
    %1504 = vmatprep.mubr.bf16.mxu0 0
    %1505 = vmatmul.mubr.bf16.gmra.mrb[0].mxu0 %v1430
    %v1506 = vpop.f32.mrb[0].mxu0
    %v1507 = vadd.f32 0.0, %v1506
    %v1508 = vpop.f32.mrb[0].mxu0
    %v1509 = vadd.f32 0.0, %v1508
    %v1510 = vpop.f32.mrb[0].mxu0
    %v1511 = vpop.f32.mrb[0].mxu0
    %1512 = vdwg.mxu0
    %v1513 = vadd.f32 %v549, %v1466
    %v1514 = vadd.f32 %v551, %v1468
    %v1515 = vadd.f32 %v622, %v1507
    %v1516 = vadd.f32 %v624, %v1509
    %v1517 = vxor.u32 %v1513, 2147483648
    %v1518 = vmul.f32 %v1517, 1.442695
    %v1519 = vpow.pop %v1518
    %v1520 = vadd.f32 %v1519, 1.0
    %v1521 = vrcp.pop %v1520
    %v1522 = vmul.f32 1.0, %v1521
    %v1523 = vxor.u32 %v1514, 2147483648
    %v1524 = vmul.f32 %v1523, 1.442695
    %v1525 = vpow.pop %v1524
    %v1526 = vadd.f32 %v1525, 1.0
    %v1527 = vrcp.pop %v1526
    %v1528 = vmul.f32 1.0, %v1527
    %v1529 = vtanh.pop %v1515
    %v1530 = vxor.u32 %v1516, 2147483648
    %v1531 = vmul.f32 %v1530, 1.442695
    %v1532 = vpow.pop %v1531
    %v1533 = vadd.f32 %v1532, 1.0
    %v1534 = vrcp.pop %v1533
    %v1535 = vmul.f32 1.0, %v1534
    %v1536 = vmul.f32 %v1528, %v1418
    %v1537 = vmul.f32 %v1522, %v1529
    %v1538 = vadd.f32 %v1536, %v1537
    %v1539 = vtanh.pop %v1538
    %v1540 = vmul.f32 %v1535, %v1539
    %s1541 = scalar_lea.vmem %s1, 40
    %v1542 = vld [vmem:[%s1541] sm:$0xff]
    %1544 = vset.pattern.permute.xlu0 0
    %1545 = vperm.xlu0 %1544, %v1542
    %v1546 = vpop.permute.xlu0 %1545
    %v1548 = vmul.f32 %v1540, %v1546
    %v1549 = vadd.f32 %v1429, %v1548
    %v1550 = vpack.c.bf16 %v1540, %v1540
    %1551 = vmatprep.subr.bf16.mxu0 %v769
    %1552 = vmatpush1.bf16.msra.mxu0 %v768
    %1553 = vmatprep.subr.bf16.mxu0 %v773
    %1554 = vmatpush1.bf16.msra.mxu0 %v772
    %1555 = vmatprep.subr.bf16.mxu0 %v777
    %1556 = vmatpush1.bf16.msra.mxu0 %v776
    %1557 = vmatprep.subr.bf16.mxu0 %v781
    %1558 = vmatpush1.bf16.msra.mxu0 %v780
    %1559 = vmatprep.subr.bf16.mxu0 %v785
    %1560 = vmatpush1.bf16.msra.mxu0 %v784
    %1561 = vmatprep.subr.bf16.mxu0 %v789
    %1562 = vmatpush1.bf16.msra.mxu0 %v788
    %1563 = vmatprep.subr.bf16.mxu0 %v793
    %1564 = vmatpush1.bf16.msra.mxu0 %v792
    %1565 = vmatprep.subr.bf16.mxu0 %v797
    %1566 = vmatpush1.bf16.msra.mxu0 %v796
    %1567 = vmatprep.subr.bf16.mxu0 0
    %1568 = vmatpush1.bf16.msra.mxu0 0
    %1569 = vmatprep.subr.bf16.mxu0 0
    %1570 = vmatpush1.bf16.msra.mxu0 0
    %1571 = vmatprep.subr.bf16.mxu0 0
    %1572 = vmatpush1.bf16.msra.mxu0 0
    %1573 = vmatprep.subr.bf16.mxu0 0
    %1574 = vmatpush1.bf16.msra.mxu0 0
    %1575 = vmatprep.subr.bf16.mxu0 0
    %1576 = vmatpush1.bf16.msra.mxu0 0
    %1577 = vmatprep.subr.bf16.mxu0 0
    %1578 = vmatpush1.bf16.msra.mxu0 0
    %1579 = vmatprep.subr.bf16.mxu0 0
    %1580 = vmatpush1.bf16.msra.mxu0 0
    %1581 = vmatprep.subr.bf16.mxu0 0
    %1582 = vmatpush1.bf16.msra.mxu0 0
    %1583 = vmatprep.mubr.bf16.mxu0 0
    %1584 = vmatmul.mubr.bf16.gmra.mrb[0].mxu0 %v1550
    %v1585 = vpop.f32.mrb[0].mxu0
    %v1586 = vadd.f32 0.0, %v1585
    %v1587 = vpop.f32.mrb[0].mxu0
    %v1588 = vadd.f32 0.0, %v1587
    %v1589 = vpop.f32.mrb[0].mxu0
    %v1590 = vpop.f32.mrb[0].mxu0
    %1591 = vdwg.mxu0
    %1592 = vmatprep.subr.bf16.mxu0 %v771
    %1593 = vmatpush1.bf16.msra.mxu0 %v770
    %1594 = vmatprep.subr.bf16.mxu0 %v775
    %1595 = vmatpush1.bf16.msra.mxu0 %v774
    %1596 = vmatprep.subr.bf16.mxu0 %v779
    %1597 = vmatpush1.bf16.msra.mxu0 %v778
    %1598 = vmatprep.subr.bf16.mxu0 %v783
    %1599 = vmatpush1.bf16.msra.mxu0 %v782
    %1600 = vmatprep.subr.bf16.mxu0 %v787
    %1601 = vmatpush1.bf16.msra.mxu0 %v786
    %1602 = vmatprep.subr.bf16.mxu0 %v791
    %1603 = vmatpush1.bf16.msra.mxu0 %v790
    %1604 = vmatprep.subr.bf16.mxu0 %v795
    %1605 = vmatpush1.bf16.msra.mxu0 %v794
    %1606 = vmatprep.subr.bf16.mxu0 %v799
    %1607 = vmatpush1.bf16.msra.mxu0 %v798
    %1608 = vmatprep.subr.bf16.mxu0 0
    %1609 = vmatpush1.bf16.msra.mxu0 0
    %1610 = vmatprep.subr.bf16.mxu0 0
    %1611 = vmatpush1.bf16.msra.mxu0 0
    %1612 = vmatprep.subr.bf16.mxu0 0
    %1613 = vmatpush1.bf16.msra.mxu0 0
    %1614 = vmatprep.subr.bf16.mxu0 0
    %1615 = vmatpush1.bf16.msra.mxu0 0
    %1616 = vmatprep.subr.bf16.mxu0 0
    %1617 = vmatpush1.bf16.msra.mxu0 0
    %1618 = vmatprep.subr.bf16.mxu0 0
    %1619 = vmatpush1.bf16.msra.mxu0 0
    %1620 = vmatprep.subr.bf16.mxu0 0
    %1621 = vmatpush1.bf16.msra.mxu0 0
    %1622 = vmatprep.subr.bf16.mxu0 0
    %1623 = vmatpush1.bf16.msra.mxu0 0
    %1624 = vmatprep.mubr.bf16.mxu0 0
    %1625 = vmatmul.mubr.bf16.gmra.mrb[0].mxu0 %v1550
    %v1626 = vpop.f32.mrb[0].mxu0
    %v1627 = vadd.f32 0.0, %v1626
    %v1628 = vpop.f32.mrb[0].mxu0
    %v1629 = vadd.f32 0.0, %v1628
    %v1630 = vpop.f32.mrb[0].mxu0
    %v1631 = vpop.f32.mrb[0].mxu0
    %1632 = vdwg.mxu0
    %v1633 = vadd.f32 %v555, %v1586
    %v1634 = vadd.f32 %v557, %v1588
    %v1635 = vadd.f32 %v628, %v1627
    %v1636 = vadd.f32 %v630, %v1629
    %v1637 = vxor.u32 %v1633, 2147483648
    %v1638 = vmul.f32 %v1637, 1.442695
    %v1639 = vpow.pop %v1638
    %v1640 = vadd.f32 %v1639, 1.0
    %v1641 = vrcp.pop %v1640
    %v1642 = vmul.f32 1.0, %v1641
    %v1643 = vxor.u32 %v1634, 2147483648
    %v1644 = vmul.f32 %v1643, 1.442695
    %v1645 = vpow.pop %v1644
    %v1646 = vadd.f32 %v1645, 1.0
    %v1647 = vrcp.pop %v1646
    %v1648 = vmul.f32 1.0, %v1647
    %v1649 = vtanh.pop %v1635
    %v1650 = vxor.u32 %v1636, 2147483648
    %v1651 = vmul.f32 %v1650, 1.442695
    %v1652 = vpow.pop %v1651
    %v1653 = vadd.f32 %v1652, 1.0
    %v1654 = vrcp.pop %v1653
    %v1655 = vmul.f32 1.0, %v1654
    %v1656 = vmul.f32 %v1648, %v1538
    %v1657 = vmul.f32 %v1642, %v1649
    %v1658 = vadd.f32 %v1656, %v1657
    %v1659 = vtanh.pop %v1658
    %v1660 = vmul.f32 %v1655, %v1659
    %s1661 = scalar_lea.vmem %s1, 48
    %v1662 = vld [vmem:[%s1661] sm:$0xff]
    %1664 = vset.pattern.permute.xlu0 0
    %1665 = vperm.xlu0 %1664, %v1662
    %v1666 = vpop.permute.xlu0 %1665
    %v1668 = vmul.f32 %v1660, %v1666
    %v1669 = vadd.f32 %v1549, %v1668
    %v1670 = vpack.c.bf16 %v1660, %v1660
    %1671 = vmatprep.subr.bf16.mxu0 %v769
    %1672 = vmatpush1.bf16.msra.mxu0 %v768
    %1673 = vmatprep.subr.bf16.mxu0 %v773
    %1674 = vmatpush1.bf16.msra.mxu0 %v772
    %1675 = vmatprep.subr.bf16.mxu0 %v777
    %1676 = vmatpush1.bf16.msra.mxu0 %v776
    %1677 = vmatprep.subr.bf16.mxu0 %v781
    %1678 = vmatpush1.bf16.msra.mxu0 %v780
    %1679 = vmatprep.subr.bf16.mxu0 %v785
    %1680 = vmatpush1.bf16.msra.mxu0 %v784
    %1681 = vmatprep.subr.bf16.mxu0 %v789
    %1682 = vmatpush1.bf16.msra.mxu0 %v788
    %1683 = vmatprep.subr.bf16.mxu0 %v793
    %1684 = vmatpush1.bf16.msra.mxu0 %v792
    %1685 = vmatprep.subr.bf16.mxu0 %v797
    %1686 = vmatpush1.bf16.msra.mxu0 %v796
    %1687 = vmatprep.subr.bf16.mxu0 0
    %1688 = vmatpush1.bf16.msra.mxu0 0
    %1689 = vmatprep.subr.bf16.mxu0 0
    %1690 = vmatpush1.bf16.msra.mxu0 0
    %1691 = vmatprep.subr.bf16.mxu0 0
    %1692 = vmatpush1.bf16.msra.mxu0 0
    %1693 = vmatprep.subr.bf16.mxu0 0
    %1694 = vmatpush1.bf16.msra.mxu0 0
    %1695 = vmatprep.subr.bf16.mxu0 0
    %1696 = vmatpush1.bf16.msra.mxu0 0
    %1697 = vmatprep.subr.bf16.mxu0 0
    %1698 = vmatpush1.bf16.msra.mxu0 0
    %1699 = vmatprep.subr.bf16.mxu0 0
    %1700 = vmatpush1.bf16.msra.mxu0 0
    %1701 = vmatprep.subr.bf16.mxu0 0
    %1702 = vmatpush1.bf16.msra.mxu0 0
    %1703 = vmatprep.mubr.bf16.mxu0 0
    %1704 = vmatmul.mubr.bf16.gmra.mrb[0].mxu0 %v1670
    %v1705 = vpop.f32.mrb[0].mxu0
    %v1706 = vadd.f32 0.0, %v1705
    %v1707 = vpop.f32.mrb[0].mxu0
    %v1708 = vadd.f32 0.0, %v1707
    %v1709 = vpop.f32.mrb[0].mxu0
    %v1710 = vpop.f32.mrb[0].mxu0
    %1711 = vdwg.mxu0
    %1712 = vmatprep.subr.bf16.mxu0 %v771
    %1713 = vmatpush1.bf16.msra.mxu0 %v770
    %1714 = vmatprep.subr.bf16.mxu0 %v775
    %1715 = vmatpush1.bf16.msra.mxu0 %v774
    %1716 = vmatprep.subr.bf16.mxu0 %v779
    %1717 = vmatpush1.bf16.msra.mxu0 %v778
    %1718 = vmatprep.subr.bf16.mxu0 %v783
    %1719 = vmatpush1.bf16.msra.mxu0 %v782
    %1720 = vmatprep.subr.bf16.mxu0 %v787
    %1721 = vmatpush1.bf16.msra.mxu0 %v786
    %1722 = vmatprep.subr.bf16.mxu0 %v791
    %1723 = vmatpush1.bf16.msra.mxu0 %v790
    %1724 = vmatprep.subr.bf16.mxu0 %v795
    %1725 = vmatpush1.bf16.msra.mxu0 %v794
    %1726 = vmatprep.subr.bf16.mxu0 %v799
    %1727 = vmatpush1.bf16.msra.mxu0 %v798
    %1728 = vmatprep.subr.bf16.mxu0 0
    %1729 = vmatpush1.bf16.msra.mxu0 0
    %1730 = vmatprep.subr.bf16.mxu0 0
    %1731 = vmatpush1.bf16.msra.mxu0 0
    %1732 = vmatprep.subr.bf16.mxu0 0
    %1733 = vmatpush1.bf16.msra.mxu0 0
    %1734 = vmatprep.subr.bf16.mxu0 0
    %1735 = vmatpush1.bf16.msra.mxu0 0
    %1736 = vmatprep.subr.bf16.mxu0 0
    %1737 = vmatpush1.bf16.msra.mxu0 0
    %1738 = vmatprep.subr.bf16.mxu0 0
    %1739 = vmatpush1.bf16.msra.mxu0 0
    %1740 = vmatprep.subr.bf16.mxu0 0
    %1741 = vmatpush1.bf16.msra.mxu0 0
    %1742 = vmatprep.subr.bf16.mxu0 0
    %1743 = vmatpush1.bf16.msra.mxu0 0
    %1744 = vmatprep.mubr.bf16.mxu0 0
    %1745 = vmatmul.mubr.bf16.gmra.mrb[0].mxu0 %v1670
    %v1746 = vpop.f32.mrb[0].mxu0
    %v1747 = vadd.f32 0.0, %v1746
    %v1748 = vpop.f32.mrb[0].mxu0
    %v1749 = vadd.f32 0.0, %v1748
    %v1750 = vpop.f32.mrb[0].mxu0
    %v1751 = vpop.f32.mrb[0].mxu0
    %1752 = vdwg.mxu0
    %v1753 = vadd.f32 %v559, %v1706
    %v1754 = vadd.f32 %v561, %v1708
    %v1755 = vadd.f32 %v632, %v1747
    %v1756 = vadd.f32 %v634, %v1749
    %v1757 = vxor.u32 %v1753, 2147483648
    %v1758 = vmul.f32 %v1757, 1.442695
    %v1759 = vpow.pop %v1758
    %v1760 = vadd.f32 %v1759, 1.0
    %v1761 = vrcp.pop %v1760
    %v1762 = vmul.f32 1.0, %v1761
    %v1763 = vxor.u32 %v1754, 2147483648
    %v1764 = vmul.f32 %v1763, 1.442695
    %v1765 = vpow.pop %v1764
    %v1766 = vadd.f32 %v1765, 1.0
    %v1767 = vrcp.pop %v1766
    %v1768 = vmul.f32 1.0, %v1767
    %v1769 = vtanh.pop %v1755
    %v1770 = vxor.u32 %v1756, 2147483648
    %v1771 = vmul.f32 %v1770, 1.442695
    %v1772 = vpow.pop %v1771
    %v1773 = vadd.f32 %v1772, 1.0
    %v1774 = vrcp.pop %v1773
    %v1775 = vmul.f32 1.0, %v1774
    %v1776 = vmul.f32 %v1768, %v1658
    %v1777 = vmul.f32 %v1762, %v1769
    %v1778 = vadd.f32 %v1776, %v1777
    %v1779 = vtanh.pop %v1778
    %v1780 = vmul.f32 %v1775, %v1779
    %s1781 = scalar_lea.vmem %s1, 56
    %v1782 = vld [vmem:[%s1781] sm:$0xff]
    %1784 = vset.pattern.permute.xlu0 0
    %1785 = vperm.xlu0 %1784, %v1782
    %v1786 = vpop.permute.xlu0 %1785
    %v1788 = vmul.f32 %v1780, %v1786
    %v1789 = vadd.f32 %v1669, %v1788
    %1790 = vst [vmem:[#allocation2] sm:$0xff] %v1780
    %1791 = vst [vmem:[#allocation3] sm:$0xff] %v1778
    %1792 = vst [vmem:[#allocation4] sm:$0xff] %v1789
    // Predicated region
    $region58: #{tpu_custom_call.1} parent=1 // pred_check
      %p1793 = pneg %p89
    $region59: #{tpu_custom_call.1} parent=1 // pred_check_branch
      %1795 = sbr.rel (%p1793) target = $region61
    $region60: #{tpu_custom_call.1} parent=1 // pred_region
      %v1796 = vld [vmem:[#allocation4] sm:$0xff]
      %v1797 = vpack.c.bf16 %v1796, %v1796
      %v1798 = vld [vmem:[#allocation11] sm:$0xf]
      %v1799 = vld [vmem:[#allocation11 + $0x4] sm:$0xf]
      %v1800 = vld [vmem:[#allocation11 + $0x8] sm:$0xf]
      %v1801 = vld [vmem:[#allocation11 + $0xc] sm:$0xf]
      %v1802 = vld [vmem:[#allocation11 + $0x10] sm:$0xf]
      %v1803 = vld [vmem:[#allocation11 + $0x14] sm:$0xf]
      %v1804 = vld [vmem:[#allocation11 + $0x18] sm:$0xf]
      %v1805 = vld [vmem:[#allocation11 + $0x1c] sm:$0xf]
      %v1806 = vld [vmem:[#allocation11 + $0x20] sm:$0xf]
      %v1807 = vld [vmem:[#allocation11 + $0x24] sm:$0xf]
      %v1808 = vld [vmem:[#allocation11 + $0x28] sm:$0xf]
      %v1809 = vld [vmem:[#allocation11 + $0x2c] sm:$0xf]
      %v1810 = vld [vmem:[#allocation11 + $0x30] sm:$0xf]
      %v1811 = vld [vmem:[#allocation11 + $0x34] sm:$0xf]
      %v1812 = vld [vmem:[#allocation11 + $0x38] sm:$0xf]
      %v1813 = vld [vmem:[#allocation11 + $0x3c] sm:$0xf]
      %v1814 = vld [vmem:[%s8] sm:$0x1]
      %v1816 = vlaneseq
      %v1817 = vshrl.u32 %v1816, 7
      %v1818 = vsub.s32 0, %v1817
      %v1819 = vrot.slane %v1814, %v1818
      %v1837 = vunpack.c.l.b16 %v1798
      %v1838 = vunpack.c.l.b16 %v1799
      %v1839 = vunpack.c.l.b16 %v1800
      %v1840 = vunpack.c.l.b16 %v1801
      %v1841 = vunpack.c.l.b16 %v1802
      %v1842 = vunpack.c.l.b16 %v1803
      %v1843 = vunpack.c.l.b16 %v1804
      %v1844 = vunpack.c.l.b16 %v1805
      %v1845 = vunpack.c.l.b16 %v1806
      %v1846 = vunpack.c.l.b16 %v1807
      %v1847 = vunpack.c.l.b16 %v1808
      %v1848 = vunpack.c.l.b16 %v1809
      %v1849 = vunpack.c.l.b16 %v1810
      %v1850 = vunpack.c.l.b16 %v1811
      %v1851 = vunpack.c.l.b16 %v1812
      %v1852 = vunpack.c.l.b16 %v1813
      %v1853 = vpack.c.b16 %v1838, %v1837
      %v1854 = vpack.c.b16 %v1840, %v1839
      %v1855 = vpack.c.b16 %v1842, %v1841
      %v1856 = vpack.c.b16 %v1844, %v1843
      %v1857 = vpack.c.b16 %v1846, %v1845
      %v1858 = vpack.c.b16 %v1848, %v1847
      %v1859 = vpack.c.b16 %v1850, %v1849
      %v1860 = vpack.c.b16 %v1852, %v1851
      %1869 = vmatprep.subr.bf16.mxu0 0
      %1870 = vmatpush1.bf16.msra.mxu0 %v1853
      %1871 = vmatprep.subr.bf16.mxu0 0
      %1872 = vmatpush1.bf16.msra.mxu0 %v1854
      %1873 = vmatprep.subr.bf16.mxu0 0
      %1874 = vmatpush1.bf16.msra.mxu0 %v1855
      %1875 = vmatprep.subr.bf16.mxu0 0
      %1876 = vmatpush1.bf16.msra.mxu0 %v1856
      %1877 = vmatprep.subr.bf16.mxu0 0
      %1878 = vmatpush1.bf16.msra.mxu0 %v1857
      %1879 = vmatprep.subr.bf16.mxu0 0
      %1880 = vmatpush1.bf16.msra.mxu0 %v1858
      %1881 = vmatprep.subr.bf16.mxu0 0
      %1882 = vmatpush1.bf16.msra.mxu0 %v1859
      %1883 = vmatprep.subr.bf16.mxu0 0
      %1884 = vmatpush1.bf16.msra.mxu0 %v1860
      %1885 = vmatprep.subr.bf16.mxu0 0
      %1886 = vmatpush1.bf16.msra.mxu0 0
      %1887 = vmatprep.subr.bf16.mxu0 0
      %1888 = vmatpush1.bf16.msra.mxu0 0
      %1889 = vmatprep.subr.bf16.mxu0 0
      %1890 = vmatpush1.bf16.msra.mxu0 0
      %1891 = vmatprep.subr.bf16.mxu0 0
      %1892 = vmatpush1.bf16.msra.mxu0 0
      %1893 = vmatprep.subr.bf16.mxu0 0
      %1894 = vmatpush1.bf16.msra.mxu0 0
      %1895 = vmatprep.subr.bf16.mxu0 0
      %1896 = vmatpush1.bf16.msra.mxu0 0
      %1897 = vmatprep.subr.bf16.mxu0 0
      %1898 = vmatpush1.bf16.msra.mxu0 0
      %1899 = vmatprep.subr.bf16.mxu0 0
      %1900 = vmatpush1.bf16.msra.mxu0 0
      %1901 = vmatprep.mubr.bf16.mxu0 0
      %1902 = vmatmul.mubr.bf16.gmra.mrb[0].mxu0 %v1797
      %v1903 = vpop.f32.mrb[0].mxu0
      %v1904 = vadd.f32 %v1819, %v1903
      %v1905 = vpop.f32.mrb[0].mxu0
      %v1906 = vpop.f32.mrb[0].mxu0
      %v1907 = vpop.f32.mrb[0].mxu0
      %1908 = vdwg.mxu0
      %1909 = vst [vmem:[#allocation13] sm:$0xff] %v1904
    $region61: #{tpu_custom_call.1} parent=1 // pred_fallthru
      _
    // Predicated region
    $region62: #{tpu_custom_call.1} parent=1 // pred_check
      _
    $region63: #{tpu_custom_call.1} parent=1 // pred_check_branch
      %1911 = sbr.rel (0) target = $region65
    $region64: #{tpu_custom_call.1} parent=1 // pred_region
      %s1913 = ssub.s32 128, 128
      %1914 = vsyncadd [#allocation7], %s1913
      %s1916 = sshll.u32 [#allocation13], 4
      %s1917 = int_to_ptr.vmem [resolvable:$true] %s1916
      %1919 = dma.vmem_to_hbm [thread:$0]  %s1917, 128, %s9, [#allocation7]
    $region65: #{tpu_custom_call.1} parent=1 // pred_fallthru
      _
    // Predicated region
    $region66: #{tpu_custom_call.1} parent=1 // pred_check
      _
    $region67: #{tpu_custom_call.1} parent=1 // pred_check_branch
      %1921 = sbr.rel (0) target = $region69
    $region68: #{tpu_custom_call.1} parent=1 // pred_region
      %1922 = dma.done [#allocation7], 128
    $region69: #{tpu_custom_call.1} parent=1 // pred_fallthru
      _
    %1923 = vsyncpa [#allocation6], 1
    %1924 = vsyncpa [#allocation9], 1
    %1925 = vsyncpa [#allocation12], 1
    %1926 = vsyncpa [#allocation7], 1

</llo_original>
